<compile_context>
chip_gen: v5e
topology: v5e:2x2
jax: 0.10.0
libtpu: 0.0.40
codegen_flags: <defaults>
</compile_context>

<pallas_src>
import jax
import jax.numpy as jnp
from jax.experimental import pallas as pl
from jax.experimental.pallas import tpu as pltpu


def _vq_kernel(e_ref, esq_ref, z_ref, idx_ref, zq_ref):
    # e_ref   : SMEM (K, C)    codebook, read as scalars in a K/C-unrolled loop
    # esq_ref : SMEM (K,)      precomputed ||e_k||^2 (hoisted out of the grid loop)
    # z_ref   : VMEM (1, C, T) activations tile: channels on sublanes, positions on lanes
    # idx_ref : VMEM (1, 1, T) int32 argmin indices (lane-dense)
    # zq_ref  : VMEM (1, C, T) gathered codebook vectors (lane-dense)
    K = e_ref.shape[0]
    C = z_ref.shape[1]
    T = z_ref.shape[2]

    z = z_ref[0].astype(jnp.float32)                       # (C, T)
    z_sq = jnp.sum(z * z, axis=0, keepdims=True)           # (1, T)

    best_d = jnp.full((1, T), jnp.inf, dtype=jnp.float32)
    best_idx = jnp.zeros((1, T), dtype=jnp.int32)
    best_rows = [jnp.zeros((1, T), dtype=jnp.float32) for _ in range(C)]

    # K-unrolled VPU path: distance, running argmin, and codebook gather fused
    # into a single pass. Strict '<' keeps the first occurrence on ties, which
    # matches torch.argmin / jnp.argmin semantics.
    for k in range(K):
        cross = e_ref[k, 0] * z[0:1, :]
        for c in range(1, C):
            cross = cross + e_ref[k, c] * z[c:c + 1, :]
        d_k = z_sq + esq_ref[k] - 2.0 * cross               # same formula as the torch code
        better = d_k < best_d                               # (1, T) bool
        best_d = jnp.where(better, d_k, best_d)
        best_idx = jnp.where(better, jnp.int32(k), best_idx)
        for c in range(C):
            best_rows[c] = jnp.where(better, e_ref[k, c], best_rows[c])

    idx_ref[...] = best_idx.reshape(idx_ref.shape)
    zq_ref[...] = jnp.concatenate(best_rows, axis=0).reshape(zq_ref.shape)


def vector_quantizer(z_e, emb_w, *, tile_hw=None):
    """z_e: (B, C, H, W) float32, emb_w: (K, C) float32.
    Returns (z_q, encoding_indices) matching the PyTorch module forward
    (indices are int32 instead of torch's int64)."""
    B, C, H, W = z_e.shape
    K = emb_w.shape[0]
    HW = H * W
    N = B * HW

    if tile_hw is None:
        tile_hw = HW  # one whole spatial slab per grid step; grid over batch
    # TODO(synk): remainder spatial tiles (HW % tile_hw != 0) would need a masked tail.
    assert HW % tile_hw == 0, "spatial extent must divide the lane tile"
    assert tile_hw == HW or tile_hw % 128 == 0, "lane tile must be full HW or a multiple of 128"

    z_chw = z_e.reshape(B, C, HW)                                  # free reshape, no HBM transpose
    e32 = emb_w.astype(jnp.float32)
    e_sq = jnp.sum(e32 * e32, axis=1)                              # (K,) hoisted out of the grid loop

    grid = (B, HW // tile_hw)
    flops = 2 * N * K * (C + 2)
    bytes_accessed = 4 * (2 * B * C * HW + B * HW + K * C + K)

    idx3d, zq_chw = pl.pallas_call(
        _vq_kernel,
        out_shape=(
            jax.ShapeDtypeStruct((B, 1, HW), jnp.int32),
            jax.ShapeDtypeStruct((B, C, HW), jnp.float32),
        ),
        grid_spec=pltpu.PrefetchScalarGridSpec(
            num_scalar_prefetch=0,
            grid=grid,
            in_specs=[
                pl.BlockSpec(memory_space=pltpu.MemorySpace.SMEM),      # codebook (K, C)
                pl.BlockSpec(memory_space=pltpu.MemorySpace.SMEM),      # ||e||^2  (K,)
                pl.BlockSpec((1, C, tile_hw), lambda b, j: (b, 0, j)),  # z tile, lane-dense
            ],
            out_specs=[
                pl.BlockSpec((1, 1, tile_hw), lambda b, j: (b, 0, j)),  # idx, lane-dense
                pl.BlockSpec((1, C, tile_hw), lambda b, j: (b, 0, j)),  # z_q, lane-dense
            ],
        ),
        compiler_params=pltpu.CompilerParams(
            dimension_semantics=("parallel", "parallel")),
        cost_estimate=pl.CostEstimate(
            flops=flops, transcendentals=0, bytes_accessed=bytes_accessed),
    )(e32, e_sq, z_chw)

    encoding_indices = idx3d.reshape(N)        # NHWC row order == torch's flatten order

    # Reproduce PyTorch's `z_q_flat.view(z_e.shape)` quirk: NHWC-ordered flat rows
    # reinterpreted RAW as NCHW. (If the reference model is ever "fixed", this is
    # the line to change.)
    zq_flat = jnp.transpose(zq_chw, (0, 2, 1)).reshape(N, C)
    z_q = zq_flat.reshape(z_e.shape)
    return z_q, encoding_indices


def _reference(z_e, emb_w):
    C = z_e.shape[1]
    z_flat = jnp.transpose(z_e, (0, 2, 3, 1)).reshape(-1, C)
    d = (jnp.sum(z_flat ** 2, axis=1, keepdims=True)
         + jnp.sum(emb_w ** 2, axis=1)
         - 2.0 * z_flat @ emb_w.T)
    idx = jnp.argmin(d, axis=1)
    zq_flat = emb_w[idx]
    return zq_flat.reshape(z_e.shape), idx


if __name__ == "__main__":
    num_embeddings = 16   # K
    embedding_dim = 4     # C
    B, H, W = 2, 16, 16

    key = jax.random.PRNGKey(0)
    k_emb, k_z = jax.random.split(key)

    # nn.Embedding weight init: uniform(-1/K, 1/K), shape (K, C)
    emb_w = jax.random.uniform(
        k_emb, (num_embeddings, embedding_dim), dtype=jnp.float32,
        minval=-1.0 / num_embeddings, maxval=1.0 / num_embeddings)

    z_e = jax.random.normal(k_z, (B, embedding_dim, H, W), dtype=jnp.float32)

    z_q, idx = vector_quantizer(z_e, emb_w)
    jax.block_until_ready((z_q, idx))

    # lightweight correctness check against a pure-JAX reference
    z_q_ref, idx_ref = _reference(z_e, emb_w)
    assert jnp.array_equal(idx, idx_ref.astype(jnp.int32)), "index mismatch"
    assert jnp.allclose(z_q, z_q_ref, atol=1e-5), "z_q mismatch"

    print("KERNEL_OK")
</pallas_src>

<mosaic_0001>
module attributes {stable_mosaic.version = 11 : i64} {
  func.func @_vq_kernel(%arg0: i32, %arg1: i32, %arg2: memref<16x4xf32, #tpu.memory_space<smem>>, %arg3: memref<16xf32, #tpu.memory_space<smem>>, %arg4: memref<1x4x256xf32, #tpu.memory_space<vmem>>, %arg5: memref<1x1x256xi32, #tpu.memory_space<vmem>>, %arg6: memref<1x4x256xf32, #tpu.memory_space<vmem>>) attributes {dimension_semantics = [#tpu.dimension_semantics<parallel>, #tpu.dimension_semantics<parallel>], iteration_bounds = array<i64: 2, 1>, scalar_prefetch = 0 : i64, scratch_operands = 0 : i64, tpu.core_type = #tpu.core_type<tc>, window_params = [{transform_indices = @transform_0, window_bounds = array<i64: 16, 4>}, {transform_indices = @transform_1, window_bounds = array<i64: 16>}, {transform_indices = @transform_2, window_bounds = array<i64: 1, 4, 256>}, {transform_indices = @transform_3, window_bounds = array<i64: 1, 1, 256>}, {transform_indices = @transform_4, window_bounds = array<i64: 1, 4, 256>}]} {
    %c0 = arith.constant 0 : index
    %c0_0 = arith.constant 0 : index
    %c0_1 = arith.constant 0 : index
    %0 = vector.load %arg4[%c0, %c0_0, %c0_1] : memref<1x4x256xf32, #tpu.memory_space<vmem>>, vector<1x4x256xf32>
    %1 = vector.shape_cast %0 : vector<1x4x256xf32> to vector<4x256xf32>
    %2 = arith.mulf %1, %1 : vector<4x256xf32>
    %cst = arith.constant dense<0.000000e+00> : vector<256xf32>
    %3 = vector.multi_reduction <add>, %2, %cst [0] : vector<4x256xf32> to vector<256xf32>
    %4 = vector.shape_cast %3 : vector<256xf32> to vector<1x256xf32>
    %cst_2 = arith.constant 0x7F800000 : f32
    %5 = vector.broadcast %cst_2 : f32 to vector<1x256xf32>
    %c0_i32 = arith.constant 0 : i32
    %6 = vector.broadcast %c0_i32 : i32 to vector<1x256xi32>
    %cst_3 = arith.constant 0.000000e+00 : f32
    %7 = vector.broadcast %cst_3 : f32 to vector<1x256xf32>
    %cst_4 = arith.constant 0.000000e+00 : f32
    %8 = vector.broadcast %cst_4 : f32 to vector<1x256xf32>
    %cst_5 = arith.constant 0.000000e+00 : f32
    %9 = vector.broadcast %cst_5 : f32 to vector<1x256xf32>
    %cst_6 = arith.constant 0.000000e+00 : f32
    %10 = vector.broadcast %cst_6 : f32 to vector<1x256xf32>
    %c0_7 = arith.constant 0 : index
    %c0_8 = arith.constant 0 : index
    %11 = memref.load %arg2[%c0_7, %c0_8] : memref<16x4xf32, #tpu.memory_space<smem>>
    %12 = vector.extract_strided_slice %1 {offsets = [0, 0], sizes = [1, 256], strides = [1, 1]} : vector<4x256xf32> to vector<1x256xf32>
    %13 = vector.broadcast %11 : f32 to vector<1x256xf32>
    %14 = arith.mulf %13, %12 : vector<1x256xf32>
    %c0_9 = arith.constant 0 : index
    %c1 = arith.constant 1 : index
    %15 = memref.load %arg2[%c0_9, %c1] : memref<16x4xf32, #tpu.memory_space<smem>>
    %16 = vector.extract_strided_slice %1 {offsets = [1, 0], sizes = [1, 256], strides = [1, 1]} : vector<4x256xf32> to vector<1x256xf32>
    %17 = vector.broadcast %15 : f32 to vector<1x256xf32>
    %18 = arith.mulf %17, %16 : vector<1x256xf32>
    %19 = arith.addf %14, %18 : vector<1x256xf32>
    %c0_10 = arith.constant 0 : index
    %c2 = arith.constant 2 : index
    %20 = memref.load %arg2[%c0_10, %c2] : memref<16x4xf32, #tpu.memory_space<smem>>
    %21 = vector.extract_strided_slice %1 {offsets = [2, 0], sizes = [1, 256], strides = [1, 1]} : vector<4x256xf32> to vector<1x256xf32>
    %22 = vector.broadcast %20 : f32 to vector<1x256xf32>
    %23 = arith.mulf %22, %21 : vector<1x256xf32>
    %24 = arith.addf %19, %23 : vector<1x256xf32>
    %c0_11 = arith.constant 0 : index
    %c3 = arith.constant 3 : index
    %25 = memref.load %arg2[%c0_11, %c3] : memref<16x4xf32, #tpu.memory_space<smem>>
    %26 = vector.extract_strided_slice %1 {offsets = [3, 0], sizes = [1, 256], strides = [1, 1]} : vector<4x256xf32> to vector<1x256xf32>
    %27 = vector.broadcast %25 : f32 to vector<1x256xf32>
    %28 = arith.mulf %27, %26 : vector<1x256xf32>
    %29 = arith.addf %24, %28 : vector<1x256xf32>
    %c0_12 = arith.constant 0 : index
    %30 = memref.load %arg3[%c0_12] : memref<16xf32, #tpu.memory_space<smem>>
    %31 = vector.broadcast %30 : f32 to vector<1x256xf32>
    %32 = arith.addf %4, %31 : vector<1x256xf32>
    %cst_13 = arith.constant 2.000000e+00 : f32
    %33 = vector.broadcast %cst_13 : f32 to vector<1x256xf32>
    %34 = arith.mulf %33, %29 : vector<1x256xf32>
    %35 = arith.subf %32, %34 : vector<1x256xf32>
    %36 = arith.cmpf olt, %35, %5 : vector<1x256xf32>
    %37 = arith.select %36, %35, %5 : vector<1x256xi1>, vector<1x256xf32>
    %c0_i32_14 = arith.constant 0 : i32
    %38 = vector.broadcast %c0_i32_14 : i32 to vector<1x256xi32>
    %39 = arith.select %36, %38, %6 : vector<1x256xi1>, vector<1x256xi32>
    %c0_15 = arith.constant 0 : index
    %c0_16 = arith.constant 0 : index
    %40 = memref.load %arg2[%c0_15, %c0_16] : memref<16x4xf32, #tpu.memory_space<smem>>
    %41 = vector.broadcast %40 : f32 to vector<1x256xf32>
    %42 = arith.select %36, %41, %7 : vector<1x256xi1>, vector<1x256xf32>
    %c0_17 = arith.constant 0 : index
    %c1_18 = arith.constant 1 : index
    %43 = memref.load %arg2[%c0_17, %c1_18] : memref<16x4xf32, #tpu.memory_space<smem>>
    %44 = vector.broadcast %43 : f32 to vector<1x256xf32>
    %45 = arith.select %36, %44, %8 : vector<1x256xi1>, vector<1x256xf32>
    %c0_19 = arith.constant 0 : index
    %c2_20 = arith.constant 2 : index
    %46 = memref.load %arg2[%c0_19, %c2_20] : memref<16x4xf32, #tpu.memory_space<smem>>
    %47 = vector.broadcast %46 : f32 to vector<1x256xf32>
    %48 = arith.select %36, %47, %9 : vector<1x256xi1>, vector<1x256xf32>
    %c0_21 = arith.constant 0 : index
    %c3_22 = arith.constant 3 : index
    %49 = memref.load %arg2[%c0_21, %c3_22] : memref<16x4xf32, #tpu.memory_space<smem>>
    %50 = vector.broadcast %49 : f32 to vector<1x256xf32>
    %51 = arith.select %36, %50, %10 : vector<1x256xi1>, vector<1x256xf32>
    %c1_23 = arith.constant 1 : index
    %c0_24 = arith.constant 0 : index
    %52 = memref.load %arg2[%c1_23, %c0_24] : memref<16x4xf32, #tpu.memory_space<smem>>
    %53 = vector.extract_strided_slice %1 {offsets = [0, 0], sizes = [1, 256], strides = [1, 1]} : vector<4x256xf32> to vector<1x256xf32>
    %54 = vector.broadcast %52 : f32 to vector<1x256xf32>
    %55 = arith.mulf %54, %53 : vector<1x256xf32>
    %c1_25 = arith.constant 1 : index
    %c1_26 = arith.constant 1 : index
    %56 = memref.load %arg2[%c1_25, %c1_26] : memref<16x4xf32, #tpu.memory_space<smem>>
    %57 = vector.extract_strided_slice %1 {offsets = [1, 0], sizes = [1, 256], strides = [1, 1]} : vector<4x256xf32> to vector<1x256xf32>
    %58 = vector.broadcast %56 : f32 to vector<1x256xf32>
    %59 = arith.mulf %58, %57 : vector<1x256xf32>
    %60 = arith.addf %55, %59 : vector<1x256xf32>
    %c1_27 = arith.constant 1 : index
    %c2_28 = arith.constant 2 : index
    %61 = memref.load %arg2[%c1_27, %c2_28] : memref<16x4xf32, #tpu.memory_space<smem>>
    %62 = vector.extract_strided_slice %1 {offsets = [2, 0], sizes = [1, 256], strides = [1, 1]} : vector<4x256xf32> to vector<1x256xf32>
    %63 = vector.broadcast %61 : f32 to vector<1x256xf32>
    %64 = arith.mulf %63, %62 : vector<1x256xf32>
    %65 = arith.addf %60, %64 : vector<1x256xf32>
    %c1_29 = arith.constant 1 : index
    %c3_30 = arith.constant 3 : index
    %66 = memref.load %arg2[%c1_29, %c3_30] : memref<16x4xf32, #tpu.memory_space<smem>>
    %67 = vector.extract_strided_slice %1 {offsets = [3, 0], sizes = [1, 256], strides = [1, 1]} : vector<4x256xf32> to vector<1x256xf32>
    %68 = vector.broadcast %66 : f32 to vector<1x256xf32>
    %69 = arith.mulf %68, %67 : vector<1x256xf32>
    %70 = arith.addf %65, %69 : vector<1x256xf32>
    %c1_31 = arith.constant 1 : index
    %71 = memref.load %arg3[%c1_31] : memref<16xf32, #tpu.memory_space<smem>>
    %72 = vector.broadcast %71 : f32 to vector<1x256xf32>
    %73 = arith.addf %4, %72 : vector<1x256xf32>
    %cst_32 = arith.constant 2.000000e+00 : f32
    %74 = vector.broadcast %cst_32 : f32 to vector<1x256xf32>
    %75 = arith.mulf %74, %70 : vector<1x256xf32>
    %76 = arith.subf %73, %75 : vector<1x256xf32>
    %77 = arith.cmpf olt, %76, %37 : vector<1x256xf32>
    %78 = arith.select %77, %76, %37 : vector<1x256xi1>, vector<1x256xf32>
    %c1_i32 = arith.constant 1 : i32
    %79 = vector.broadcast %c1_i32 : i32 to vector<1x256xi32>
    %80 = arith.select %77, %79, %39 : vector<1x256xi1>, vector<1x256xi32>
    %c1_33 = arith.constant 1 : index
    %c0_34 = arith.constant 0 : index
    %81 = memref.load %arg2[%c1_33, %c0_34] : memref<16x4xf32, #tpu.memory_space<smem>>
    %82 = vector.broadcast %81 : f32 to vector<1x256xf32>
    %83 = arith.select %77, %82, %42 : vector<1x256xi1>, vector<1x256xf32>
    %c1_35 = arith.constant 1 : index
    %c1_36 = arith.constant 1 : index
    %84 = memref.load %arg2[%c1_35, %c1_36] : memref<16x4xf32, #tpu.memory_space<smem>>
    %85 = vector.broadcast %84 : f32 to vector<1x256xf32>
    %86 = arith.select %77, %85, %45 : vector<1x256xi1>, vector<1x256xf32>
    %c1_37 = arith.constant 1 : index
    %c2_38 = arith.constant 2 : index
    %87 = memref.load %arg2[%c1_37, %c2_38] : memref<16x4xf32, #tpu.memory_space<smem>>
    %88 = vector.broadcast %87 : f32 to vector<1x256xf32>
    %89 = arith.select %77, %88, %48 : vector<1x256xi1>, vector<1x256xf32>
    %c1_39 = arith.constant 1 : index
    %c3_40 = arith.constant 3 : index
    %90 = memref.load %arg2[%c1_39, %c3_40] : memref<16x4xf32, #tpu.memory_space<smem>>
    %91 = vector.broadcast %90 : f32 to vector<1x256xf32>
    %92 = arith.select %77, %91, %51 : vector<1x256xi1>, vector<1x256xf32>
    %c2_41 = arith.constant 2 : index
    %c0_42 = arith.constant 0 : index
    %93 = memref.load %arg2[%c2_41, %c0_42] : memref<16x4xf32, #tpu.memory_space<smem>>
    %94 = vector.extract_strided_slice %1 {offsets = [0, 0], sizes = [1, 256], strides = [1, 1]} : vector<4x256xf32> to vector<1x256xf32>
    %95 = vector.broadcast %93 : f32 to vector<1x256xf32>
    %96 = arith.mulf %95, %94 : vector<1x256xf32>
    %c2_43 = arith.constant 2 : index
    %c1_44 = arith.constant 1 : index
    %97 = memref.load %arg2[%c2_43, %c1_44] : memref<16x4xf32, #tpu.memory_space<smem>>
    %98 = vector.extract_strided_slice %1 {offsets = [1, 0], sizes = [1, 256], strides = [1, 1]} : vector<4x256xf32> to vector<1x256xf32>
    %99 = vector.broadcast %97 : f32 to vector<1x256xf32>
    %100 = arith.mulf %99, %98 : vector<1x256xf32>
    %101 = arith.addf %96, %100 : vector<1x256xf32>
    %c2_45 = arith.constant 2 : index
    %c2_46 = arith.constant 2 : index
    %102 = memref.load %arg2[%c2_45, %c2_46] : memref<16x4xf32, #tpu.memory_space<smem>>
    %103 = vector.extract_strided_slice %1 {offsets = [2, 0], sizes = [1, 256], strides = [1, 1]} : vector<4x256xf32> to vector<1x256xf32>
    %104 = vector.broadcast %102 : f32 to vector<1x256xf32>
    %105 = arith.mulf %104, %103 : vector<1x256xf32>
    %106 = arith.addf %101, %105 : vector<1x256xf32>
    %c2_47 = arith.constant 2 : index
    %c3_48 = arith.constant 3 : index
    %107 = memref.load %arg2[%c2_47, %c3_48] : memref<16x4xf32, #tpu.memory_space<smem>>
    %108 = vector.extract_strided_slice %1 {offsets = [3, 0], sizes = [1, 256], strides = [1, 1]} : vector<4x256xf32> to vector<1x256xf32>
    %109 = vector.broadcast %107 : f32 to vector<1x256xf32>
    %110 = arith.mulf %109, %108 : vector<1x256xf32>
    %111 = arith.addf %106, %110 : vector<1x256xf32>
    %c2_49 = arith.constant 2 : index
    %112 = memref.load %arg3[%c2_49] : memref<16xf32, #tpu.memory_space<smem>>
    %113 = vector.broadcast %112 : f32 to vector<1x256xf32>
    %114 = arith.addf %4, %113 : vector<1x256xf32>
    %cst_50 = arith.constant 2.000000e+00 : f32
    %115 = vector.broadcast %cst_50 : f32 to vector<1x256xf32>
    %116 = arith.mulf %115, %111 : vector<1x256xf32>
    %117 = arith.subf %114, %116 : vector<1x256xf32>
    %118 = arith.cmpf olt, %117, %78 : vector<1x256xf32>
    %119 = arith.select %118, %117, %78 : vector<1x256xi1>, vector<1x256xf32>
    %c2_i32 = arith.constant 2 : i32
    %120 = vector.broadcast %c2_i32 : i32 to vector<1x256xi32>
    %121 = arith.select %118, %120, %80 : vector<1x256xi1>, vector<1x256xi32>
    %c2_51 = arith.constant 2 : index
    %c0_52 = arith.constant 0 : index
    %122 = memref.load %arg2[%c2_51, %c0_52] : memref<16x4xf32, #tpu.memory_space<smem>>
    %123 = vector.broadcast %122 : f32 to vector<1x256xf32>
    %124 = arith.select %118, %123, %83 : vector<1x256xi1>, vector<1x256xf32>
    %c2_53 = arith.constant 2 : index
    %c1_54 = arith.constant 1 : index
    %125 = memref.load %arg2[%c2_53, %c1_54] : memref<16x4xf32, #tpu.memory_space<smem>>
    %126 = vector.broadcast %125 : f32 to vector<1x256xf32>
    %127 = arith.select %118, %126, %86 : vector<1x256xi1>, vector<1x256xf32>
    %c2_55 = arith.constant 2 : index
    %c2_56 = arith.constant 2 : index
    %128 = memref.load %arg2[%c2_55, %c2_56] : memref<16x4xf32, #tpu.memory_space<smem>>
    %129 = vector.broadcast %128 : f32 to vector<1x256xf32>
    %130 = arith.select %118, %129, %89 : vector<1x256xi1>, vector<1x256xf32>
    %c2_57 = arith.constant 2 : index
    %c3_58 = arith.constant 3 : index
    %131 = memref.load %arg2[%c2_57, %c3_58] : memref<16x4xf32, #tpu.memory_space<smem>>
    %132 = vector.broadcast %131 : f32 to vector<1x256xf32>
    %133 = arith.select %118, %132, %92 : vector<1x256xi1>, vector<1x256xf32>
    %c3_59 = arith.constant 3 : index
    %c0_60 = arith.constant 0 : index
    %134 = memref.load %arg2[%c3_59, %c0_60] : memref<16x4xf32, #tpu.memory_space<smem>>
    %135 = vector.extract_strided_slice %1 {offsets = [0, 0], sizes = [1, 256], strides = [1, 1]} : vector<4x256xf32> to vector<1x256xf32>
    %136 = vector.broadcast %134 : f32 to vector<1x256xf32>
    %137 = arith.mulf %136, %135 : vector<1x256xf32>
    %c3_61 = arith.constant 3 : index
    %c1_62 = arith.constant 1 : index
    %138 = memref.load %arg2[%c3_61, %c1_62] : memref<16x4xf32, #tpu.memory_space<smem>>
    %139 = vector.extract_strided_slice %1 {offsets = [1, 0], sizes = [1, 256], strides = [1, 1]} : vector<4x256xf32> to vector<1x256xf32>
    %140 = vector.broadcast %138 : f32 to vector<1x256xf32>
    %141 = arith.mulf %140, %139 : vector<1x256xf32>
    %142 = arith.addf %137, %141 : vector<1x256xf32>
    %c3_63 = arith.constant 3 : index
    %c2_64 = arith.constant 2 : index
    %143 = memref.load %arg2[%c3_63, %c2_64] : memref<16x4xf32, #tpu.memory_space<smem>>
    %144 = vector.extract_strided_slice %1 {offsets = [2, 0], sizes = [1, 256], strides = [1, 1]} : vector<4x256xf32> to vector<1x256xf32>
    %145 = vector.broadcast %143 : f32 to vector<1x256xf32>
    %146 = arith.mulf %145, %144 : vector<1x256xf32>
    %147 = arith.addf %142, %146 : vector<1x256xf32>
    %c3_65 = arith.constant 3 : index
    %c3_66 = arith.constant 3 : index
    %148 = memref.load %arg2[%c3_65, %c3_66] : memref<16x4xf32, #tpu.memory_space<smem>>
    %149 = vector.extract_strided_slice %1 {offsets = [3, 0], sizes = [1, 256], strides = [1, 1]} : vector<4x256xf32> to vector<1x256xf32>
    %150 = vector.broadcast %148 : f32 to vector<1x256xf32>
    %151 = arith.mulf %150, %149 : vector<1x256xf32>
    %152 = arith.addf %147, %151 : vector<1x256xf32>
    %c3_67 = arith.constant 3 : index
    %153 = memref.load %arg3[%c3_67] : memref<16xf32, #tpu.memory_space<smem>>
    %154 = vector.broadcast %153 : f32 to vector<1x256xf32>
    %155 = arith.addf %4, %154 : vector<1x256xf32>
    %cst_68 = arith.constant 2.000000e+00 : f32
    %156 = vector.broadcast %cst_68 : f32 to vector<1x256xf32>
    %157 = arith.mulf %156, %152 : vector<1x256xf32>
    %158 = arith.subf %155, %157 : vector<1x256xf32>
    %159 = arith.cmpf olt, %158, %119 : vector<1x256xf32>
    %160 = arith.select %159, %158, %119 : vector<1x256xi1>, vector<1x256xf32>
    %c3_i32 = arith.constant 3 : i32
    %161 = vector.broadcast %c3_i32 : i32 to vector<1x256xi32>
    %162 = arith.select %159, %161, %121 : vector<1x256xi1>, vector<1x256xi32>
    %c3_69 = arith.constant 3 : index
    %c0_70 = arith.constant 0 : index
    %163 = memref.load %arg2[%c3_69, %c0_70] : memref<16x4xf32, #tpu.memory_space<smem>>
    %164 = vector.broadcast %163 : f32 to vector<1x256xf32>
    %165 = arith.select %159, %164, %124 : vector<1x256xi1>, vector<1x256xf32>
    %c3_71 = arith.constant 3 : index
    %c1_72 = arith.constant 1 : index
    %166 = memref.load %arg2[%c3_71, %c1_72] : memref<16x4xf32, #tpu.memory_space<smem>>
    %167 = vector.broadcast %166 : f32 to vector<1x256xf32>
    %168 = arith.select %159, %167, %127 : vector<1x256xi1>, vector<1x256xf32>
    %c3_73 = arith.constant 3 : index
    %c2_74 = arith.constant 2 : index
    %169 = memref.load %arg2[%c3_73, %c2_74] : memref<16x4xf32, #tpu.memory_space<smem>>
    %170 = vector.broadcast %169 : f32 to vector<1x256xf32>
    %171 = arith.select %159, %170, %130 : vector<1x256xi1>, vector<1x256xf32>
    %c3_75 = arith.constant 3 : index
    %c3_76 = arith.constant 3 : index
    %172 = memref.load %arg2[%c3_75, %c3_76] : memref<16x4xf32, #tpu.memory_space<smem>>
    %173 = vector.broadcast %172 : f32 to vector<1x256xf32>
    %174 = arith.select %159, %173, %133 : vector<1x256xi1>, vector<1x256xf32>
    %c4 = arith.constant 4 : index
    %c0_77 = arith.constant 0 : index
    %175 = memref.load %arg2[%c4, %c0_77] : memref<16x4xf32, #tpu.memory_space<smem>>
    %176 = vector.extract_strided_slice %1 {offsets = [0, 0], sizes = [1, 256], strides = [1, 1]} : vector<4x256xf32> to vector<1x256xf32>
    %177 = vector.broadcast %175 : f32 to vector<1x256xf32>
    %178 = arith.mulf %177, %176 : vector<1x256xf32>
    %c4_78 = arith.constant 4 : index
    %c1_79 = arith.constant 1 : index
    %179 = memref.load %arg2[%c4_78, %c1_79] : memref<16x4xf32, #tpu.memory_space<smem>>
    %180 = vector.extract_strided_slice %1 {offsets = [1, 0], sizes = [1, 256], strides = [1, 1]} : vector<4x256xf32> to vector<1x256xf32>
    %181 = vector.broadcast %179 : f32 to vector<1x256xf32>
    %182 = arith.mulf %181, %180 : vector<1x256xf32>
    %183 = arith.addf %178, %182 : vector<1x256xf32>
    %c4_80 = arith.constant 4 : index
    %c2_81 = arith.constant 2 : index
    %184 = memref.load %arg2[%c4_80, %c2_81] : memref<16x4xf32, #tpu.memory_space<smem>>
    %185 = vector.extract_strided_slice %1 {offsets = [2, 0], sizes = [1, 256], strides = [1, 1]} : vector<4x256xf32> to vector<1x256xf32>
    %186 = vector.broadcast %184 : f32 to vector<1x256xf32>
    %187 = arith.mulf %186, %185 : vector<1x256xf32>
    %188 = arith.addf %183, %187 : vector<1x256xf32>
    %c4_82 = arith.constant 4 : index
    %c3_83 = arith.constant 3 : index
    %189 = memref.load %arg2[%c4_82, %c3_83] : memref<16x4xf32, #tpu.memory_space<smem>>
    %190 = vector.extract_strided_slice %1 {offsets = [3, 0], sizes = [1, 256], strides = [1, 1]} : vector<4x256xf32> to vector<1x256xf32>
    %191 = vector.broadcast %189 : f32 to vector<1x256xf32>
    %192 = arith.mulf %191, %190 : vector<1x256xf32>
    %193 = arith.addf %188, %192 : vector<1x256xf32>
    %c4_84 = arith.constant 4 : index
    %194 = memref.load %arg3[%c4_84] : memref<16xf32, #tpu.memory_space<smem>>
    %195 = vector.broadcast %194 : f32 to vector<1x256xf32>
    %196 = arith.addf %4, %195 : vector<1x256xf32>
    %cst_85 = arith.constant 2.000000e+00 : f32
    %197 = vector.broadcast %cst_85 : f32 to vector<1x256xf32>
    %198 = arith.mulf %197, %193 : vector<1x256xf32>
    %199 = arith.subf %196, %198 : vector<1x256xf32>
    %200 = arith.cmpf olt, %199, %160 : vector<1x256xf32>
    %201 = arith.select %200, %199, %160 : vector<1x256xi1>, vector<1x256xf32>
    %c4_i32 = arith.constant 4 : i32
    %202 = vector.broadcast %c4_i32 : i32 to vector<1x256xi32>
    %203 = arith.select %200, %202, %162 : vector<1x256xi1>, vector<1x256xi32>
    %c4_86 = arith.constant 4 : index
    %c0_87 = arith.constant 0 : index
    %204 = memref.load %arg2[%c4_86, %c0_87] : memref<16x4xf32, #tpu.memory_space<smem>>
    %205 = vector.broadcast %204 : f32 to vector<1x256xf32>
    %206 = arith.select %200, %205, %165 : vector<1x256xi1>, vector<1x256xf32>
    %c4_88 = arith.constant 4 : index
    %c1_89 = arith.constant 1 : index
    %207 = memref.load %arg2[%c4_88, %c1_89] : memref<16x4xf32, #tpu.memory_space<smem>>
    %208 = vector.broadcast %207 : f32 to vector<1x256xf32>
    %209 = arith.select %200, %208, %168 : vector<1x256xi1>, vector<1x256xf32>
    %c4_90 = arith.constant 4 : index
    %c2_91 = arith.constant 2 : index
    %210 = memref.load %arg2[%c4_90, %c2_91] : memref<16x4xf32, #tpu.memory_space<smem>>
    %211 = vector.broadcast %210 : f32 to vector<1x256xf32>
    %212 = arith.select %200, %211, %171 : vector<1x256xi1>, vector<1x256xf32>
    %c4_92 = arith.constant 4 : index
    %c3_93 = arith.constant 3 : index
    %213 = memref.load %arg2[%c4_92, %c3_93] : memref<16x4xf32, #tpu.memory_space<smem>>
    %214 = vector.broadcast %213 : f32 to vector<1x256xf32>
    %215 = arith.select %200, %214, %174 : vector<1x256xi1>, vector<1x256xf32>
    %c5 = arith.constant 5 : index
    %c0_94 = arith.constant 0 : index
    %216 = memref.load %arg2[%c5, %c0_94] : memref<16x4xf32, #tpu.memory_space<smem>>
    %217 = vector.extract_strided_slice %1 {offsets = [0, 0], sizes = [1, 256], strides = [1, 1]} : vector<4x256xf32> to vector<1x256xf32>
    %218 = vector.broadcast %216 : f32 to vector<1x256xf32>
    %219 = arith.mulf %218, %217 : vector<1x256xf32>
    %c5_95 = arith.constant 5 : index
    %c1_96 = arith.constant 1 : index
    %220 = memref.load %arg2[%c5_95, %c1_96] : memref<16x4xf32, #tpu.memory_space<smem>>
    %221 = vector.extract_strided_slice %1 {offsets = [1, 0], sizes = [1, 256], strides = [1, 1]} : vector<4x256xf32> to vector<1x256xf32>
    %222 = vector.broadcast %220 : f32 to vector<1x256xf32>
    %223 = arith.mulf %222, %221 : vector<1x256xf32>
    %224 = arith.addf %219, %223 : vector<1x256xf32>
    %c5_97 = arith.constant 5 : index
    %c2_98 = arith.constant 2 : index
    %225 = memref.load %arg2[%c5_97, %c2_98] : memref<16x4xf32, #tpu.memory_space<smem>>
    %226 = vector.extract_strided_slice %1 {offsets = [2, 0], sizes = [1, 256], strides = [1, 1]} : vector<4x256xf32> to vector<1x256xf32>
    %227 = vector.broadcast %225 : f32 to vector<1x256xf32>
    %228 = arith.mulf %227, %226 : vector<1x256xf32>
    %229 = arith.addf %224, %228 : vector<1x256xf32>
    %c5_99 = arith.constant 5 : index
    %c3_100 = arith.constant 3 : index
    %230 = memref.load %arg2[%c5_99, %c3_100] : memref<16x4xf32, #tpu.memory_space<smem>>
    %231 = vector.extract_strided_slice %1 {offsets = [3, 0], sizes = [1, 256], strides = [1, 1]} : vector<4x256xf32> to vector<1x256xf32>
    %232 = vector.broadcast %230 : f32 to vector<1x256xf32>
    %233 = arith.mulf %232, %231 : vector<1x256xf32>
    %234 = arith.addf %229, %233 : vector<1x256xf32>
    %c5_101 = arith.constant 5 : index
    %235 = memref.load %arg3[%c5_101] : memref<16xf32, #tpu.memory_space<smem>>
    %236 = vector.broadcast %235 : f32 to vector<1x256xf32>
    %237 = arith.addf %4, %236 : vector<1x256xf32>
    %cst_102 = arith.constant 2.000000e+00 : f32
    %238 = vector.broadcast %cst_102 : f32 to vector<1x256xf32>
    %239 = arith.mulf %238, %234 : vector<1x256xf32>
    %240 = arith.subf %237, %239 : vector<1x256xf32>
    %241 = arith.cmpf olt, %240, %201 : vector<1x256xf32>
    %242 = arith.select %241, %240, %201 : vector<1x256xi1>, vector<1x256xf32>
    %c5_i32 = arith.constant 5 : i32
    %243 = vector.broadcast %c5_i32 : i32 to vector<1x256xi32>
    %244 = arith.select %241, %243, %203 : vector<1x256xi1>, vector<1x256xi32>
    %c5_103 = arith.constant 5 : index
    %c0_104 = arith.constant 0 : index
    %245 = memref.load %arg2[%c5_103, %c0_104] : memref<16x4xf32, #tpu.memory_space<smem>>
    %246 = vector.broadcast %245 : f32 to vector<1x256xf32>
    %247 = arith.select %241, %246, %206 : vector<1x256xi1>, vector<1x256xf32>
    %c5_105 = arith.constant 5 : index
    %c1_106 = arith.constant 1 : index
    %248 = memref.load %arg2[%c5_105, %c1_106] : memref<16x4xf32, #tpu.memory_space<smem>>
    %249 = vector.broadcast %248 : f32 to vector<1x256xf32>
    %250 = arith.select %241, %249, %209 : vector<1x256xi1>, vector<1x256xf32>
    %c5_107 = arith.constant 5 : index
    %c2_108 = arith.constant 2 : index
    %251 = memref.load %arg2[%c5_107, %c2_108] : memref<16x4xf32, #tpu.memory_space<smem>>
    %252 = vector.broadcast %251 : f32 to vector<1x256xf32>
    %253 = arith.select %241, %252, %212 : vector<1x256xi1>, vector<1x256xf32>
    %c5_109 = arith.constant 5 : index
    %c3_110 = arith.constant 3 : index
    %254 = memref.load %arg2[%c5_109, %c3_110] : memref<16x4xf32, #tpu.memory_space<smem>>
    %255 = vector.broadcast %254 : f32 to vector<1x256xf32>
    %256 = arith.select %241, %255, %215 : vector<1x256xi1>, vector<1x256xf32>
    %c6 = arith.constant 6 : index
    %c0_111 = arith.constant 0 : index
    %257 = memref.load %arg2[%c6, %c0_111] : memref<16x4xf32, #tpu.memory_space<smem>>
    %258 = vector.extract_strided_slice %1 {offsets = [0, 0], sizes = [1, 256], strides = [1, 1]} : vector<4x256xf32> to vector<1x256xf32>
    %259 = vector.broadcast %257 : f32 to vector<1x256xf32>
    %260 = arith.mulf %259, %258 : vector<1x256xf32>
    %c6_112 = arith.constant 6 : index
    %c1_113 = arith.constant 1 : index
    %261 = memref.load %arg2[%c6_112, %c1_113] : memref<16x4xf32, #tpu.memory_space<smem>>
    %262 = vector.extract_strided_slice %1 {offsets = [1, 0], sizes = [1, 256], strides = [1, 1]} : vector<4x256xf32> to vector<1x256xf32>
    %263 = vector.broadcast %261 : f32 to vector<1x256xf32>
    %264 = arith.mulf %263, %262 : vector<1x256xf32>
    %265 = arith.addf %260, %264 : vector<1x256xf32>
    %c6_114 = arith.constant 6 : index
    %c2_115 = arith.constant 2 : index
    %266 = memref.load %arg2[%c6_114, %c2_115] : memref<16x4xf32, #tpu.memory_space<smem>>
    %267 = vector.extract_strided_slice %1 {offsets = [2, 0], sizes = [1, 256], strides = [1, 1]} : vector<4x256xf32> to vector<1x256xf32>
    %268 = vector.broadcast %266 : f32 to vector<1x256xf32>
    %269 = arith.mulf %268, %267 : vector<1x256xf32>
    %270 = arith.addf %265, %269 : vector<1x256xf32>
    %c6_116 = arith.constant 6 : index
    %c3_117 = arith.constant 3 : index
    %271 = memref.load %arg2[%c6_116, %c3_117] : memref<16x4xf32, #tpu.memory_space<smem>>
    %272 = vector.extract_strided_slice %1 {offsets = [3, 0], sizes = [1, 256], strides = [1, 1]} : vector<4x256xf32> to vector<1x256xf32>
    %273 = vector.broadcast %271 : f32 to vector<1x256xf32>
    %274 = arith.mulf %273, %272 : vector<1x256xf32>
    %275 = arith.addf %270, %274 : vector<1x256xf32>
    %c6_118 = arith.constant 6 : index
    %276 = memref.load %arg3[%c6_118] : memref<16xf32, #tpu.memory_space<smem>>
    %277 = vector.broadcast %276 : f32 to vector<1x256xf32>
    %278 = arith.addf %4, %277 : vector<1x256xf32>
    %cst_119 = arith.constant 2.000000e+00 : f32
    %279 = vector.broadcast %cst_119 : f32 to vector<1x256xf32>
    %280 = arith.mulf %279, %275 : vector<1x256xf32>
    %281 = arith.subf %278, %280 : vector<1x256xf32>
    %282 = arith.cmpf olt, %281, %242 : vector<1x256xf32>
    %283 = arith.select %282, %281, %242 : vector<1x256xi1>, vector<1x256xf32>
    %c6_i32 = arith.constant 6 : i32
    %284 = vector.broadcast %c6_i32 : i32 to vector<1x256xi32>
    %285 = arith.select %282, %284, %244 : vector<1x256xi1>, vector<1x256xi32>
    %c6_120 = arith.constant 6 : index
    %c0_121 = arith.constant 0 : index
    %286 = memref.load %arg2[%c6_120, %c0_121] : memref<16x4xf32, #tpu.memory_space<smem>>
    %287 = vector.broadcast %286 : f32 to vector<1x256xf32>
    %288 = arith.select %282, %287, %247 : vector<1x256xi1>, vector<1x256xf32>
    %c6_122 = arith.constant 6 : index
    %c1_123 = arith.constant 1 : index
    %289 = memref.load %arg2[%c6_122, %c1_123] : memref<16x4xf32, #tpu.memory_space<smem>>
    %290 = vector.broadcast %289 : f32 to vector<1x256xf32>
    %291 = arith.select %282, %290, %250 : vector<1x256xi1>, vector<1x256xf32>
    %c6_124 = arith.constant 6 : index
    %c2_125 = arith.constant 2 : index
    %292 = memref.load %arg2[%c6_124, %c2_125] : memref<16x4xf32, #tpu.memory_space<smem>>
    %293 = vector.broadcast %292 : f32 to vector<1x256xf32>
    %294 = arith.select %282, %293, %253 : vector<1x256xi1>, vector<1x256xf32>
    %c6_126 = arith.constant 6 : index
    %c3_127 = arith.constant 3 : index
    %295 = memref.load %arg2[%c6_126, %c3_127] : memref<16x4xf32, #tpu.memory_space<smem>>
    %296 = vector.broadcast %295 : f32 to vector<1x256xf32>
    %297 = arith.select %282, %296, %256 : vector<1x256xi1>, vector<1x256xf32>
    %c7 = arith.constant 7 : index
    %c0_128 = arith.constant 0 : index
    %298 = memref.load %arg2[%c7, %c0_128] : memref<16x4xf32, #tpu.memory_space<smem>>
    %299 = vector.extract_strided_slice %1 {offsets = [0, 0], sizes = [1, 256], strides = [1, 1]} : vector<4x256xf32> to vector<1x256xf32>
    %300 = vector.broadcast %298 : f32 to vector<1x256xf32>
    %301 = arith.mulf %300, %299 : vector<1x256xf32>
    %c7_129 = arith.constant 7 : index
    %c1_130 = arith.constant 1 : index
    %302 = memref.load %arg2[%c7_129, %c1_130] : memref<16x4xf32, #tpu.memory_space<smem>>
    %303 = vector.extract_strided_slice %1 {offsets = [1, 0], sizes = [1, 256], strides = [1, 1]} : vector<4x256xf32> to vector<1x256xf32>
    %304 = vector.broadcast %302 : f32 to vector<1x256xf32>
    %305 = arith.mulf %304, %303 : vector<1x256xf32>
    %306 = arith.addf %301, %305 : vector<1x256xf32>
    %c7_131 = arith.constant 7 : index
    %c2_132 = arith.constant 2 : index
    %307 = memref.load %arg2[%c7_131, %c2_132] : memref<16x4xf32, #tpu.memory_space<smem>>
    %308 = vector.extract_strided_slice %1 {offsets = [2, 0], sizes = [1, 256], strides = [1, 1]} : vector<4x256xf32> to vector<1x256xf32>
    %309 = vector.broadcast %307 : f32 to vector<1x256xf32>
    %310 = arith.mulf %309, %308 : vector<1x256xf32>
    %311 = arith.addf %306, %310 : vector<1x256xf32>
    %c7_133 = arith.constant 7 : index
    %c3_134 = arith.constant 3 : index
    %312 = memref.load %arg2[%c7_133, %c3_134] : memref<16x4xf32, #tpu.memory_space<smem>>
    %313 = vector.extract_strided_slice %1 {offsets = [3, 0], sizes = [1, 256], strides = [1, 1]} : vector<4x256xf32> to vector<1x256xf32>
    %314 = vector.broadcast %312 : f32 to vector<1x256xf32>
    %315 = arith.mulf %314, %313 : vector<1x256xf32>
    %316 = arith.addf %311, %315 : vector<1x256xf32>
    %c7_135 = arith.constant 7 : index
    %317 = memref.load %arg3[%c7_135] : memref<16xf32, #tpu.memory_space<smem>>
    %318 = vector.broadcast %317 : f32 to vector<1x256xf32>
    %319 = arith.addf %4, %318 : vector<1x256xf32>
    %cst_136 = arith.constant 2.000000e+00 : f32
    %320 = vector.broadcast %cst_136 : f32 to vector<1x256xf32>
    %321 = arith.mulf %320, %316 : vector<1x256xf32>
    %322 = arith.subf %319, %321 : vector<1x256xf32>
    %323 = arith.cmpf olt, %322, %283 : vector<1x256xf32>
    %324 = arith.select %323, %322, %283 : vector<1x256xi1>, vector<1x256xf32>
    %c7_i32 = arith.constant 7 : i32
    %325 = vector.broadcast %c7_i32 : i32 to vector<1x256xi32>
    %326 = arith.select %323, %325, %285 : vector<1x256xi1>, vector<1x256xi32>
    %c7_137 = arith.constant 7 : index
    %c0_138 = arith.constant 0 : index
    %327 = memref.load %arg2[%c7_137, %c0_138] : memref<16x4xf32, #tpu.memory_space<smem>>
    %328 = vector.broadcast %327 : f32 to vector<1x256xf32>
    %329 = arith.select %323, %328, %288 : vector<1x256xi1>, vector<1x256xf32>
    %c7_139 = arith.constant 7 : index
    %c1_140 = arith.constant 1 : index
    %330 = memref.load %arg2[%c7_139, %c1_140] : memref<16x4xf32, #tpu.memory_space<smem>>
    %331 = vector.broadcast %330 : f32 to vector<1x256xf32>
    %332 = arith.select %323, %331, %291 : vector<1x256xi1>, vector<1x256xf32>
    %c7_141 = arith.constant 7 : index
    %c2_142 = arith.constant 2 : index
    %333 = memref.load %arg2[%c7_141, %c2_142] : memref<16x4xf32, #tpu.memory_space<smem>>
    %334 = vector.broadcast %333 : f32 to vector<1x256xf32>
    %335 = arith.select %323, %334, %294 : vector<1x256xi1>, vector<1x256xf32>
    %c7_143 = arith.constant 7 : index
    %c3_144 = arith.constant 3 : index
    %336 = memref.load %arg2[%c7_143, %c3_144] : memref<16x4xf32, #tpu.memory_space<smem>>
    %337 = vector.broadcast %336 : f32 to vector<1x256xf32>
    %338 = arith.select %323, %337, %297 : vector<1x256xi1>, vector<1x256xf32>
    %c8 = arith.constant 8 : index
    %c0_145 = arith.constant 0 : index
    %339 = memref.load %arg2[%c8, %c0_145] : memref<16x4xf32, #tpu.memory_space<smem>>
    %340 = vector.extract_strided_slice %1 {offsets = [0, 0], sizes = [1, 256], strides = [1, 1]} : vector<4x256xf32> to vector<1x256xf32>
    %341 = vector.broadcast %339 : f32 to vector<1x256xf32>
    %342 = arith.mulf %341, %340 : vector<1x256xf32>
    %c8_146 = arith.constant 8 : index
    %c1_147 = arith.constant 1 : index
    %343 = memref.load %arg2[%c8_146, %c1_147] : memref<16x4xf32, #tpu.memory_space<smem>>
    %344 = vector.extract_strided_slice %1 {offsets = [1, 0], sizes = [1, 256], strides = [1, 1]} : vector<4x256xf32> to vector<1x256xf32>
    %345 = vector.broadcast %343 : f32 to vector<1x256xf32>
    %346 = arith.mulf %345, %344 : vector<1x256xf32>
    %347 = arith.addf %342, %346 : vector<1x256xf32>
    %c8_148 = arith.constant 8 : index
    %c2_149 = arith.constant 2 : index
    %348 = memref.load %arg2[%c8_148, %c2_149] : memref<16x4xf32, #tpu.memory_space<smem>>
    %349 = vector.extract_strided_slice %1 {offsets = [2, 0], sizes = [1, 256], strides = [1, 1]} : vector<4x256xf32> to vector<1x256xf32>
    %350 = vector.broadcast %348 : f32 to vector<1x256xf32>
    %351 = arith.mulf %350, %349 : vector<1x256xf32>
    %352 = arith.addf %347, %351 : vector<1x256xf32>
    %c8_150 = arith.constant 8 : index
    %c3_151 = arith.constant 3 : index
    %353 = memref.load %arg2[%c8_150, %c3_151] : memref<16x4xf32, #tpu.memory_space<smem>>
    %354 = vector.extract_strided_slice %1 {offsets = [3, 0], sizes = [1, 256], strides = [1, 1]} : vector<4x256xf32> to vector<1x256xf32>
    %355 = vector.broadcast %353 : f32 to vector<1x256xf32>
    %356 = arith.mulf %355, %354 : vector<1x256xf32>
    %357 = arith.addf %352, %356 : vector<1x256xf32>
    %c8_152 = arith.constant 8 : index
    %358 = memref.load %arg3[%c8_152] : memref<16xf32, #tpu.memory_space<smem>>
    %359 = vector.broadcast %358 : f32 to vector<1x256xf32>
    %360 = arith.addf %4, %359 : vector<1x256xf32>
    %cst_153 = arith.constant 2.000000e+00 : f32
    %361 = vector.broadcast %cst_153 : f32 to vector<1x256xf32>
    %362 = arith.mulf %361, %357 : vector<1x256xf32>
    %363 = arith.subf %360, %362 : vector<1x256xf32>
    %364 = arith.cmpf olt, %363, %324 : vector<1x256xf32>
    %365 = arith.select %364, %363, %324 : vector<1x256xi1>, vector<1x256xf32>
    %c8_i32 = arith.constant 8 : i32
    %366 = vector.broadcast %c8_i32 : i32 to vector<1x256xi32>
    %367 = arith.select %364, %366, %326 : vector<1x256xi1>, vector<1x256xi32>
    %c8_154 = arith.constant 8 : index
    %c0_155 = arith.constant 0 : index
    %368 = memref.load %arg2[%c8_154, %c0_155] : memref<16x4xf32, #tpu.memory_space<smem>>
    %369 = vector.broadcast %368 : f32 to vector<1x256xf32>
    %370 = arith.select %364, %369, %329 : vector<1x256xi1>, vector<1x256xf32>
    %c8_156 = arith.constant 8 : index
    %c1_157 = arith.constant 1 : index
    %371 = memref.load %arg2[%c8_156, %c1_157] : memref<16x4xf32, #tpu.memory_space<smem>>
    %372 = vector.broadcast %371 : f32 to vector<1x256xf32>
    %373 = arith.select %364, %372, %332 : vector<1x256xi1>, vector<1x256xf32>
    %c8_158 = arith.constant 8 : index
    %c2_159 = arith.constant 2 : index
    %374 = memref.load %arg2[%c8_158, %c2_159] : memref<16x4xf32, #tpu.memory_space<smem>>
    %375 = vector.broadcast %374 : f32 to vector<1x256xf32>
    %376 = arith.select %364, %375, %335 : vector<1x256xi1>, vector<1x256xf32>
    %c8_160 = arith.constant 8 : index
    %c3_161 = arith.constant 3 : index
    %377 = memref.load %arg2[%c8_160, %c3_161] : memref<16x4xf32, #tpu.memory_space<smem>>
    %378 = vector.broadcast %377 : f32 to vector<1x256xf32>
    %379 = arith.select %364, %378, %338 : vector<1x256xi1>, vector<1x256xf32>
    %c9 = arith.constant 9 : index
    %c0_162 = arith.constant 0 : index
    %380 = memref.load %arg2[%c9, %c0_162] : memref<16x4xf32, #tpu.memory_space<smem>>
    %381 = vector.extract_strided_slice %1 {offsets = [0, 0], sizes = [1, 256], strides = [1, 1]} : vector<4x256xf32> to vector<1x256xf32>
    %382 = vector.broadcast %380 : f32 to vector<1x256xf32>
    %383 = arith.mulf %382, %381 : vector<1x256xf32>
    %c9_163 = arith.constant 9 : index
    %c1_164 = arith.constant 1 : index
    %384 = memref.load %arg2[%c9_163, %c1_164] : memref<16x4xf32, #tpu.memory_space<smem>>
    %385 = vector.extract_strided_slice %1 {offsets = [1, 0], sizes = [1, 256], strides = [1, 1]} : vector<4x256xf32> to vector<1x256xf32>
    %386 = vector.broadcast %384 : f32 to vector<1x256xf32>
    %387 = arith.mulf %386, %385 : vector<1x256xf32>
    %388 = arith.addf %383, %387 : vector<1x256xf32>
    %c9_165 = arith.constant 9 : index
    %c2_166 = arith.constant 2 : index
    %389 = memref.load %arg2[%c9_165, %c2_166] : memref<16x4xf32, #tpu.memory_space<smem>>
    %390 = vector.extract_strided_slice %1 {offsets = [2, 0], sizes = [1, 256], strides = [1, 1]} : vector<4x256xf32> to vector<1x256xf32>
    %391 = vector.broadcast %389 : f32 to vector<1x256xf32>
    %392 = arith.mulf %391, %390 : vector<1x256xf32>
    %393 = arith.addf %388, %392 : vector<1x256xf32>
    %c9_167 = arith.constant 9 : index
    %c3_168 = arith.constant 3 : index
    %394 = memref.load %arg2[%c9_167, %c3_168] : memref<16x4xf32, #tpu.memory_space<smem>>
    %395 = vector.extract_strided_slice %1 {offsets = [3, 0], sizes = [1, 256], strides = [1, 1]} : vector<4x256xf32> to vector<1x256xf32>
    %396 = vector.broadcast %394 : f32 to vector<1x256xf32>
    %397 = arith.mulf %396, %395 : vector<1x256xf32>
    %398 = arith.addf %393, %397 : vector<1x256xf32>
    %c9_169 = arith.constant 9 : index
    %399 = memref.load %arg3[%c9_169] : memref<16xf32, #tpu.memory_space<smem>>
    %400 = vector.broadcast %399 : f32 to vector<1x256xf32>
    %401 = arith.addf %4, %400 : vector<1x256xf32>
    %cst_170 = arith.constant 2.000000e+00 : f32
    %402 = vector.broadcast %cst_170 : f32 to vector<1x256xf32>
    %403 = arith.mulf %402, %398 : vector<1x256xf32>
    %404 = arith.subf %401, %403 : vector<1x256xf32>
    %405 = arith.cmpf olt, %404, %365 : vector<1x256xf32>
    %406 = arith.select %405, %404, %365 : vector<1x256xi1>, vector<1x256xf32>
    %c9_i32 = arith.constant 9 : i32
    %407 = vector.broadcast %c9_i32 : i32 to vector<1x256xi32>
    %408 = arith.select %405, %407, %367 : vector<1x256xi1>, vector<1x256xi32>
    %c9_171 = arith.constant 9 : index
    %c0_172 = arith.constant 0 : index
    %409 = memref.load %arg2[%c9_171, %c0_172] : memref<16x4xf32, #tpu.memory_space<smem>>
    %410 = vector.broadcast %409 : f32 to vector<1x256xf32>
    %411 = arith.select %405, %410, %370 : vector<1x256xi1>, vector<1x256xf32>
    %c9_173 = arith.constant 9 : index
    %c1_174 = arith.constant 1 : index
    %412 = memref.load %arg2[%c9_173, %c1_174] : memref<16x4xf32, #tpu.memory_space<smem>>
    %413 = vector.broadcast %412 : f32 to vector<1x256xf32>
    %414 = arith.select %405, %413, %373 : vector<1x256xi1>, vector<1x256xf32>
    %c9_175 = arith.constant 9 : index
    %c2_176 = arith.constant 2 : index
    %415 = memref.load %arg2[%c9_175, %c2_176] : memref<16x4xf32, #tpu.memory_space<smem>>
    %416 = vector.broadcast %415 : f32 to vector<1x256xf32>
    %417 = arith.select %405, %416, %376 : vector<1x256xi1>, vector<1x256xf32>
    %c9_177 = arith.constant 9 : index
    %c3_178 = arith.constant 3 : index
    %418 = memref.load %arg2[%c9_177, %c3_178] : memref<16x4xf32, #tpu.memory_space<smem>>
    %419 = vector.broadcast %418 : f32 to vector<1x256xf32>
    %420 = arith.select %405, %419, %379 : vector<1x256xi1>, vector<1x256xf32>
    %c10 = arith.constant 10 : index
    %c0_179 = arith.constant 0 : index
    %421 = memref.load %arg2[%c10, %c0_179] : memref<16x4xf32, #tpu.memory_space<smem>>
    %422 = vector.extract_strided_slice %1 {offsets = [0, 0], sizes = [1, 256], strides = [1, 1]} : vector<4x256xf32> to vector<1x256xf32>
    %423 = vector.broadcast %421 : f32 to vector<1x256xf32>
    %424 = arith.mulf %423, %422 : vector<1x256xf32>
    %c10_180 = arith.constant 10 : index
    %c1_181 = arith.constant 1 : index
    %425 = memref.load %arg2[%c10_180, %c1_181] : memref<16x4xf32, #tpu.memory_space<smem>>
    %426 = vector.extract_strided_slice %1 {offsets = [1, 0], sizes = [1, 256], strides = [1, 1]} : vector<4x256xf32> to vector<1x256xf32>
    %427 = vector.broadcast %425 : f32 to vector<1x256xf32>
    %428 = arith.mulf %427, %426 : vector<1x256xf32>
    %429 = arith.addf %424, %428 : vector<1x256xf32>
    %c10_182 = arith.constant 10 : index
    %c2_183 = arith.constant 2 : index
    %430 = memref.load %arg2[%c10_182, %c2_183] : memref<16x4xf32, #tpu.memory_space<smem>>
    %431 = vector.extract_strided_slice %1 {offsets = [2, 0], sizes = [1, 256], strides = [1, 1]} : vector<4x256xf32> to vector<1x256xf32>
    %432 = vector.broadcast %430 : f32 to vector<1x256xf32>
    %433 = arith.mulf %432, %431 : vector<1x256xf32>
    %434 = arith.addf %429, %433 : vector<1x256xf32>
    %c10_184 = arith.constant 10 : index
    %c3_185 = arith.constant 3 : index
    %435 = memref.load %arg2[%c10_184, %c3_185] : memref<16x4xf32, #tpu.memory_space<smem>>
    %436 = vector.extract_strided_slice %1 {offsets = [3, 0], sizes = [1, 256], strides = [1, 1]} : vector<4x256xf32> to vector<1x256xf32>
    %437 = vector.broadcast %435 : f32 to vector<1x256xf32>
    %438 = arith.mulf %437, %436 : vector<1x256xf32>
    %439 = arith.addf %434, %438 : vector<1x256xf32>
    %c10_186 = arith.constant 10 : index
    %440 = memref.load %arg3[%c10_186] : memref<16xf32, #tpu.memory_space<smem>>
    %441 = vector.broadcast %440 : f32 to vector<1x256xf32>
    %442 = arith.addf %4, %441 : vector<1x256xf32>
    %cst_187 = arith.constant 2.000000e+00 : f32
    %443 = vector.broadcast %cst_187 : f32 to vector<1x256xf32>
    %444 = arith.mulf %443, %439 : vector<1x256xf32>
    %445 = arith.subf %442, %444 : vector<1x256xf32>
    %446 = arith.cmpf olt, %445, %406 : vector<1x256xf32>
    %447 = arith.select %446, %445, %406 : vector<1x256xi1>, vector<1x256xf32>
    %c10_i32 = arith.constant 10 : i32
    %448 = vector.broadcast %c10_i32 : i32 to vector<1x256xi32>
    %449 = arith.select %446, %448, %408 : vector<1x256xi1>, vector<1x256xi32>
    %c10_188 = arith.constant 10 : index
    %c0_189 = arith.constant 0 : index
    %450 = memref.load %arg2[%c10_188, %c0_189] : memref<16x4xf32, #tpu.memory_space<smem>>
    %451 = vector.broadcast %450 : f32 to vector<1x256xf32>
    %452 = arith.select %446, %451, %411 : vector<1x256xi1>, vector<1x256xf32>
    %c10_190 = arith.constant 10 : index
    %c1_191 = arith.constant 1 : index
    %453 = memref.load %arg2[%c10_190, %c1_191] : memref<16x4xf32, #tpu.memory_space<smem>>
    %454 = vector.broadcast %453 : f32 to vector<1x256xf32>
    %455 = arith.select %446, %454, %414 : vector<1x256xi1>, vector<1x256xf32>
    %c10_192 = arith.constant 10 : index
    %c2_193 = arith.constant 2 : index
    %456 = memref.load %arg2[%c10_192, %c2_193] : memref<16x4xf32, #tpu.memory_space<smem>>
    %457 = vector.broadcast %456 : f32 to vector<1x256xf32>
    %458 = arith.select %446, %457, %417 : vector<1x256xi1>, vector<1x256xf32>
    %c10_194 = arith.constant 10 : index
    %c3_195 = arith.constant 3 : index
    %459 = memref.load %arg2[%c10_194, %c3_195] : memref<16x4xf32, #tpu.memory_space<smem>>
    %460 = vector.broadcast %459 : f32 to vector<1x256xf32>
    %461 = arith.select %446, %460, %420 : vector<1x256xi1>, vector<1x256xf32>
    %c11 = arith.constant 11 : index
    %c0_196 = arith.constant 0 : index
    %462 = memref.load %arg2[%c11, %c0_196] : memref<16x4xf32, #tpu.memory_space<smem>>
    %463 = vector.extract_strided_slice %1 {offsets = [0, 0], sizes = [1, 256], strides = [1, 1]} : vector<4x256xf32> to vector<1x256xf32>
    %464 = vector.broadcast %462 : f32 to vector<1x256xf32>
    %465 = arith.mulf %464, %463 : vector<1x256xf32>
    %c11_197 = arith.constant 11 : index
    %c1_198 = arith.constant 1 : index
    %466 = memref.load %arg2[%c11_197, %c1_198] : memref<16x4xf32, #tpu.memory_space<smem>>
    %467 = vector.extract_strided_slice %1 {offsets = [1, 0], sizes = [1, 256], strides = [1, 1]} : vector<4x256xf32> to vector<1x256xf32>
    %468 = vector.broadcast %466 : f32 to vector<1x256xf32>
    %469 = arith.mulf %468, %467 : vector<1x256xf32>
    %470 = arith.addf %465, %469 : vector<1x256xf32>
    %c11_199 = arith.constant 11 : index
    %c2_200 = arith.constant 2 : index
    %471 = memref.load %arg2[%c11_199, %c2_200] : memref<16x4xf32, #tpu.memory_space<smem>>
    %472 = vector.extract_strided_slice %1 {offsets = [2, 0], sizes = [1, 256], strides = [1, 1]} : vector<4x256xf32> to vector<1x256xf32>
    %473 = vector.broadcast %471 : f32 to vector<1x256xf32>
    %474 = arith.mulf %473, %472 : vector<1x256xf32>
    %475 = arith.addf %470, %474 : vector<1x256xf32>
    %c11_201 = arith.constant 11 : index
    %c3_202 = arith.constant 3 : index
    %476 = memref.load %arg2[%c11_201, %c3_202] : memref<16x4xf32, #tpu.memory_space<smem>>
    %477 = vector.extract_strided_slice %1 {offsets = [3, 0], sizes = [1, 256], strides = [1, 1]} : vector<4x256xf32> to vector<1x256xf32>
    %478 = vector.broadcast %476 : f32 to vector<1x256xf32>
    %479 = arith.mulf %478, %477 : vector<1x256xf32>
    %480 = arith.addf %475, %479 : vector<1x256xf32>
    %c11_203 = arith.constant 11 : index
    %481 = memref.load %arg3[%c11_203] : memref<16xf32, #tpu.memory_space<smem>>
    %482 = vector.broadcast %481 : f32 to vector<1x256xf32>
    %483 = arith.addf %4, %482 : vector<1x256xf32>
    %cst_204 = arith.constant 2.000000e+00 : f32
    %484 = vector.broadcast %cst_204 : f32 to vector<1x256xf32>
    %485 = arith.mulf %484, %480 : vector<1x256xf32>
    %486 = arith.subf %483, %485 : vector<1x256xf32>
    %487 = arith.cmpf olt, %486, %447 : vector<1x256xf32>
    %488 = arith.select %487, %486, %447 : vector<1x256xi1>, vector<1x256xf32>
    %c11_i32 = arith.constant 11 : i32
    %489 = vector.broadcast %c11_i32 : i32 to vector<1x256xi32>
    %490 = arith.select %487, %489, %449 : vector<1x256xi1>, vector<1x256xi32>
    %c11_205 = arith.constant 11 : index
    %c0_206 = arith.constant 0 : index
    %491 = memref.load %arg2[%c11_205, %c0_206] : memref<16x4xf32, #tpu.memory_space<smem>>
    %492 = vector.broadcast %491 : f32 to vector<1x256xf32>
    %493 = arith.select %487, %492, %452 : vector<1x256xi1>, vector<1x256xf32>
    %c11_207 = arith.constant 11 : index
    %c1_208 = arith.constant 1 : index
    %494 = memref.load %arg2[%c11_207, %c1_208] : memref<16x4xf32, #tpu.memory_space<smem>>
    %495 = vector.broadcast %494 : f32 to vector<1x256xf32>
    %496 = arith.select %487, %495, %455 : vector<1x256xi1>, vector<1x256xf32>
    %c11_209 = arith.constant 11 : index
    %c2_210 = arith.constant 2 : index
    %497 = memref.load %arg2[%c11_209, %c2_210] : memref<16x4xf32, #tpu.memory_space<smem>>
    %498 = vector.broadcast %497 : f32 to vector<1x256xf32>
    %499 = arith.select %487, %498, %458 : vector<1x256xi1>, vector<1x256xf32>
    %c11_211 = arith.constant 11 : index
    %c3_212 = arith.constant 3 : index
    %500 = memref.load %arg2[%c11_211, %c3_212] : memref<16x4xf32, #tpu.memory_space<smem>>
    %501 = vector.broadcast %500 : f32 to vector<1x256xf32>
    %502 = arith.select %487, %501, %461 : vector<1x256xi1>, vector<1x256xf32>
    %c12 = arith.constant 12 : index
    %c0_213 = arith.constant 0 : index
    %503 = memref.load %arg2[%c12, %c0_213] : memref<16x4xf32, #tpu.memory_space<smem>>
    %504 = vector.extract_strided_slice %1 {offsets = [0, 0], sizes = [1, 256], strides = [1, 1]} : vector<4x256xf32> to vector<1x256xf32>
    %505 = vector.broadcast %503 : f32 to vector<1x256xf32>
    %506 = arith.mulf %505, %504 : vector<1x256xf32>
    %c12_214 = arith.constant 12 : index
    %c1_215 = arith.constant 1 : index
    %507 = memref.load %arg2[%c12_214, %c1_215] : memref<16x4xf32, #tpu.memory_space<smem>>
    %508 = vector.extract_strided_slice %1 {offsets = [1, 0], sizes = [1, 256], strides = [1, 1]} : vector<4x256xf32> to vector<1x256xf32>
    %509 = vector.broadcast %507 : f32 to vector<1x256xf32>
    %510 = arith.mulf %509, %508 : vector<1x256xf32>
    %511 = arith.addf %506, %510 : vector<1x256xf32>
    %c12_216 = arith.constant 12 : index
    %c2_217 = arith.constant 2 : index
    %512 = memref.load %arg2[%c12_216, %c2_217] : memref<16x4xf32, #tpu.memory_space<smem>>
    %513 = vector.extract_strided_slice %1 {offsets = [2, 0], sizes = [1, 256], strides = [1, 1]} : vector<4x256xf32> to vector<1x256xf32>
    %514 = vector.broadcast %512 : f32 to vector<1x256xf32>
    %515 = arith.mulf %514, %513 : vector<1x256xf32>
    %516 = arith.addf %511, %515 : vector<1x256xf32>
    %c12_218 = arith.constant 12 : index
    %c3_219 = arith.constant 3 : index
    %517 = memref.load %arg2[%c12_218, %c3_219] : memref<16x4xf32, #tpu.memory_space<smem>>
    %518 = vector.extract_strided_slice %1 {offsets = [3, 0], sizes = [1, 256], strides = [1, 1]} : vector<4x256xf32> to vector<1x256xf32>
    %519 = vector.broadcast %517 : f32 to vector<1x256xf32>
    %520 = arith.mulf %519, %518 : vector<1x256xf32>
    %521 = arith.addf %516, %520 : vector<1x256xf32>
    %c12_220 = arith.constant 12 : index
    %522 = memref.load %arg3[%c12_220] : memref<16xf32, #tpu.memory_space<smem>>
    %523 = vector.broadcast %522 : f32 to vector<1x256xf32>
    %524 = arith.addf %4, %523 : vector<1x256xf32>
    %cst_221 = arith.constant 2.000000e+00 : f32
    %525 = vector.broadcast %cst_221 : f32 to vector<1x256xf32>
    %526 = arith.mulf %525, %521 : vector<1x256xf32>
    %527 = arith.subf %524, %526 : vector<1x256xf32>
    %528 = arith.cmpf olt, %527, %488 : vector<1x256xf32>
    %529 = arith.select %528, %527, %488 : vector<1x256xi1>, vector<1x256xf32>
    %c12_i32 = arith.constant 12 : i32
    %530 = vector.broadcast %c12_i32 : i32 to vector<1x256xi32>
    %531 = arith.select %528, %530, %490 : vector<1x256xi1>, vector<1x256xi32>
    %c12_222 = arith.constant 12 : index
    %c0_223 = arith.constant 0 : index
    %532 = memref.load %arg2[%c12_222, %c0_223] : memref<16x4xf32, #tpu.memory_space<smem>>
    %533 = vector.broadcast %532 : f32 to vector<1x256xf32>
    %534 = arith.select %528, %533, %493 : vector<1x256xi1>, vector<1x256xf32>
    %c12_224 = arith.constant 12 : index
    %c1_225 = arith.constant 1 : index
    %535 = memref.load %arg2[%c12_224, %c1_225] : memref<16x4xf32, #tpu.memory_space<smem>>
    %536 = vector.broadcast %535 : f32 to vector<1x256xf32>
    %537 = arith.select %528, %536, %496 : vector<1x256xi1>, vector<1x256xf32>
    %c12_226 = arith.constant 12 : index
    %c2_227 = arith.constant 2 : index
    %538 = memref.load %arg2[%c12_226, %c2_227] : memref<16x4xf32, #tpu.memory_space<smem>>
    %539 = vector.broadcast %538 : f32 to vector<1x256xf32>
    %540 = arith.select %528, %539, %499 : vector<1x256xi1>, vector<1x256xf32>
    %c12_228 = arith.constant 12 : index
    %c3_229 = arith.constant 3 : index
    %541 = memref.load %arg2[%c12_228, %c3_229] : memref<16x4xf32, #tpu.memory_space<smem>>
    %542 = vector.broadcast %541 : f32 to vector<1x256xf32>
    %543 = arith.select %528, %542, %502 : vector<1x256xi1>, vector<1x256xf32>
    %c13 = arith.constant 13 : index
    %c0_230 = arith.constant 0 : index
    %544 = memref.load %arg2[%c13, %c0_230] : memref<16x4xf32, #tpu.memory_space<smem>>
    %545 = vector.extract_strided_slice %1 {offsets = [0, 0], sizes = [1, 256], strides = [1, 1]} : vector<4x256xf32> to vector<1x256xf32>
    %546 = vector.broadcast %544 : f32 to vector<1x256xf32>
    %547 = arith.mulf %546, %545 : vector<1x256xf32>
    %c13_231 = arith.constant 13 : index
    %c1_232 = arith.constant 1 : index
    %548 = memref.load %arg2[%c13_231, %c1_232] : memref<16x4xf32, #tpu.memory_space<smem>>
    %549 = vector.extract_strided_slice %1 {offsets = [1, 0], sizes = [1, 256], strides = [1, 1]} : vector<4x256xf32> to vector<1x256xf32>
    %550 = vector.broadcast %548 : f32 to vector<1x256xf32>
    %551 = arith.mulf %550, %549 : vector<1x256xf32>
    %552 = arith.addf %547, %551 : vector<1x256xf32>
    %c13_233 = arith.constant 13 : index
    %c2_234 = arith.constant 2 : index
    %553 = memref.load %arg2[%c13_233, %c2_234] : memref<16x4xf32, #tpu.memory_space<smem>>
    %554 = vector.extract_strided_slice %1 {offsets = [2, 0], sizes = [1, 256], strides = [1, 1]} : vector<4x256xf32> to vector<1x256xf32>
    %555 = vector.broadcast %553 : f32 to vector<1x256xf32>
    %556 = arith.mulf %555, %554 : vector<1x256xf32>
    %557 = arith.addf %552, %556 : vector<1x256xf32>
    %c13_235 = arith.constant 13 : index
    %c3_236 = arith.constant 3 : index
    %558 = memref.load %arg2[%c13_235, %c3_236] : memref<16x4xf32, #tpu.memory_space<smem>>
    %559 = vector.extract_strided_slice %1 {offsets = [3, 0], sizes = [1, 256], strides = [1, 1]} : vector<4x256xf32> to vector<1x256xf32>
    %560 = vector.broadcast %558 : f32 to vector<1x256xf32>
    %561 = arith.mulf %560, %559 : vector<1x256xf32>
    %562 = arith.addf %557, %561 : vector<1x256xf32>
    %c13_237 = arith.constant 13 : index
    %563 = memref.load %arg3[%c13_237] : memref<16xf32, #tpu.memory_space<smem>>
    %564 = vector.broadcast %563 : f32 to vector<1x256xf32>
    %565 = arith.addf %4, %564 : vector<1x256xf32>
    %cst_238 = arith.constant 2.000000e+00 : f32
    %566 = vector.broadcast %cst_238 : f32 to vector<1x256xf32>
    %567 = arith.mulf %566, %562 : vector<1x256xf32>
    %568 = arith.subf %565, %567 : vector<1x256xf32>
    %569 = arith.cmpf olt, %568, %529 : vector<1x256xf32>
    %570 = arith.select %569, %568, %529 : vector<1x256xi1>, vector<1x256xf32>
    %c13_i32 = arith.constant 13 : i32
    %571 = vector.broadcast %c13_i32 : i32 to vector<1x256xi32>
    %572 = arith.select %569, %571, %531 : vector<1x256xi1>, vector<1x256xi32>
    %c13_239 = arith.constant 13 : index
    %c0_240 = arith.constant 0 : index
    %573 = memref.load %arg2[%c13_239, %c0_240] : memref<16x4xf32, #tpu.memory_space<smem>>
    %574 = vector.broadcast %573 : f32 to vector<1x256xf32>
    %575 = arith.select %569, %574, %534 : vector<1x256xi1>, vector<1x256xf32>
    %c13_241 = arith.constant 13 : index
    %c1_242 = arith.constant 1 : index
    %576 = memref.load %arg2[%c13_241, %c1_242] : memref<16x4xf32, #tpu.memory_space<smem>>
    %577 = vector.broadcast %576 : f32 to vector<1x256xf32>
    %578 = arith.select %569, %577, %537 : vector<1x256xi1>, vector<1x256xf32>
    %c13_243 = arith.constant 13 : index
    %c2_244 = arith.constant 2 : index
    %579 = memref.load %arg2[%c13_243, %c2_244] : memref<16x4xf32, #tpu.memory_space<smem>>
    %580 = vector.broadcast %579 : f32 to vector<1x256xf32>
    %581 = arith.select %569, %580, %540 : vector<1x256xi1>, vector<1x256xf32>
    %c13_245 = arith.constant 13 : index
    %c3_246 = arith.constant 3 : index
    %582 = memref.load %arg2[%c13_245, %c3_246] : memref<16x4xf32, #tpu.memory_space<smem>>
    %583 = vector.broadcast %582 : f32 to vector<1x256xf32>
    %584 = arith.select %569, %583, %543 : vector<1x256xi1>, vector<1x256xf32>
    %c14 = arith.constant 14 : index
    %c0_247 = arith.constant 0 : index
    %585 = memref.load %arg2[%c14, %c0_247] : memref<16x4xf32, #tpu.memory_space<smem>>
    %586 = vector.extract_strided_slice %1 {offsets = [0, 0], sizes = [1, 256], strides = [1, 1]} : vector<4x256xf32> to vector<1x256xf32>
    %587 = vector.broadcast %585 : f32 to vector<1x256xf32>
    %588 = arith.mulf %587, %586 : vector<1x256xf32>
    %c14_248 = arith.constant 14 : index
    %c1_249 = arith.constant 1 : index
    %589 = memref.load %arg2[%c14_248, %c1_249] : memref<16x4xf32, #tpu.memory_space<smem>>
    %590 = vector.extract_strided_slice %1 {offsets = [1, 0], sizes = [1, 256], strides = [1, 1]} : vector<4x256xf32> to vector<1x256xf32>
    %591 = vector.broadcast %589 : f32 to vector<1x256xf32>
    %592 = arith.mulf %591, %590 : vector<1x256xf32>
    %593 = arith.addf %588, %592 : vector<1x256xf32>
    %c14_250 = arith.constant 14 : index
    %c2_251 = arith.constant 2 : index
    %594 = memref.load %arg2[%c14_250, %c2_251] : memref<16x4xf32, #tpu.memory_space<smem>>
    %595 = vector.extract_strided_slice %1 {offsets = [2, 0], sizes = [1, 256], strides = [1, 1]} : vector<4x256xf32> to vector<1x256xf32>
    %596 = vector.broadcast %594 : f32 to vector<1x256xf32>
    %597 = arith.mulf %596, %595 : vector<1x256xf32>
    %598 = arith.addf %593, %597 : vector<1x256xf32>
    %c14_252 = arith.constant 14 : index
    %c3_253 = arith.constant 3 : index
    %599 = memref.load %arg2[%c14_252, %c3_253] : memref<16x4xf32, #tpu.memory_space<smem>>
    %600 = vector.extract_strided_slice %1 {offsets = [3, 0], sizes = [1, 256], strides = [1, 1]} : vector<4x256xf32> to vector<1x256xf32>
    %601 = vector.broadcast %599 : f32 to vector<1x256xf32>
    %602 = arith.mulf %601, %600 : vector<1x256xf32>
    %603 = arith.addf %598, %602 : vector<1x256xf32>
    %c14_254 = arith.constant 14 : index
    %604 = memref.load %arg3[%c14_254] : memref<16xf32, #tpu.memory_space<smem>>
    %605 = vector.broadcast %604 : f32 to vector<1x256xf32>
    %606 = arith.addf %4, %605 : vector<1x256xf32>
    %cst_255 = arith.constant 2.000000e+00 : f32
    %607 = vector.broadcast %cst_255 : f32 to vector<1x256xf32>
    %608 = arith.mulf %607, %603 : vector<1x256xf32>
    %609 = arith.subf %606, %608 : vector<1x256xf32>
    %610 = arith.cmpf olt, %609, %570 : vector<1x256xf32>
    %611 = arith.select %610, %609, %570 : vector<1x256xi1>, vector<1x256xf32>
    %c14_i32 = arith.constant 14 : i32
    %612 = vector.broadcast %c14_i32 : i32 to vector<1x256xi32>
    %613 = arith.select %610, %612, %572 : vector<1x256xi1>, vector<1x256xi32>
    %c14_256 = arith.constant 14 : index
    %c0_257 = arith.constant 0 : index
    %614 = memref.load %arg2[%c14_256, %c0_257] : memref<16x4xf32, #tpu.memory_space<smem>>
    %615 = vector.broadcast %614 : f32 to vector<1x256xf32>
    %616 = arith.select %610, %615, %575 : vector<1x256xi1>, vector<1x256xf32>
    %c14_258 = arith.constant 14 : index
    %c1_259 = arith.constant 1 : index
    %617 = memref.load %arg2[%c14_258, %c1_259] : memref<16x4xf32, #tpu.memory_space<smem>>
    %618 = vector.broadcast %617 : f32 to vector<1x256xf32>
    %619 = arith.select %610, %618, %578 : vector<1x256xi1>, vector<1x256xf32>
    %c14_260 = arith.constant 14 : index
    %c2_261 = arith.constant 2 : index
    %620 = memref.load %arg2[%c14_260, %c2_261] : memref<16x4xf32, #tpu.memory_space<smem>>
    %621 = vector.broadcast %620 : f32 to vector<1x256xf32>
    %622 = arith.select %610, %621, %581 : vector<1x256xi1>, vector<1x256xf32>
    %c14_262 = arith.constant 14 : index
    %c3_263 = arith.constant 3 : index
    %623 = memref.load %arg2[%c14_262, %c3_263] : memref<16x4xf32, #tpu.memory_space<smem>>
    %624 = vector.broadcast %623 : f32 to vector<1x256xf32>
    %625 = arith.select %610, %624, %584 : vector<1x256xi1>, vector<1x256xf32>
    %c15 = arith.constant 15 : index
    %c0_264 = arith.constant 0 : index
    %626 = memref.load %arg2[%c15, %c0_264] : memref<16x4xf32, #tpu.memory_space<smem>>
    %627 = vector.extract_strided_slice %1 {offsets = [0, 0], sizes = [1, 256], strides = [1, 1]} : vector<4x256xf32> to vector<1x256xf32>
    %628 = vector.broadcast %626 : f32 to vector<1x256xf32>
    %629 = arith.mulf %628, %627 : vector<1x256xf32>
    %c15_265 = arith.constant 15 : index
    %c1_266 = arith.constant 1 : index
    %630 = memref.load %arg2[%c15_265, %c1_266] : memref<16x4xf32, #tpu.memory_space<smem>>
    %631 = vector.extract_strided_slice %1 {offsets = [1, 0], sizes = [1, 256], strides = [1, 1]} : vector<4x256xf32> to vector<1x256xf32>
    %632 = vector.broadcast %630 : f32 to vector<1x256xf32>
    %633 = arith.mulf %632, %631 : vector<1x256xf32>
    %634 = arith.addf %629, %633 : vector<1x256xf32>
    %c15_267 = arith.constant 15 : index
    %c2_268 = arith.constant 2 : index
    %635 = memref.load %arg2[%c15_267, %c2_268] : memref<16x4xf32, #tpu.memory_space<smem>>
    %636 = vector.extract_strided_slice %1 {offsets = [2, 0], sizes = [1, 256], strides = [1, 1]} : vector<4x256xf32> to vector<1x256xf32>
    %637 = vector.broadcast %635 : f32 to vector<1x256xf32>
    %638 = arith.mulf %637, %636 : vector<1x256xf32>
    %639 = arith.addf %634, %638 : vector<1x256xf32>
    %c15_269 = arith.constant 15 : index
    %c3_270 = arith.constant 3 : index
    %640 = memref.load %arg2[%c15_269, %c3_270] : memref<16x4xf32, #tpu.memory_space<smem>>
    %641 = vector.extract_strided_slice %1 {offsets = [3, 0], sizes = [1, 256], strides = [1, 1]} : vector<4x256xf32> to vector<1x256xf32>
    %642 = vector.broadcast %640 : f32 to vector<1x256xf32>
    %643 = arith.mulf %642, %641 : vector<1x256xf32>
    %644 = arith.addf %639, %643 : vector<1x256xf32>
    %c15_271 = arith.constant 15 : index
    %645 = memref.load %arg3[%c15_271] : memref<16xf32, #tpu.memory_space<smem>>
    %646 = vector.broadcast %645 : f32 to vector<1x256xf32>
    %647 = arith.addf %4, %646 : vector<1x256xf32>
    %cst_272 = arith.constant 2.000000e+00 : f32
    %648 = vector.broadcast %cst_272 : f32 to vector<1x256xf32>
    %649 = arith.mulf %648, %644 : vector<1x256xf32>
    %650 = arith.subf %647, %649 : vector<1x256xf32>
    %651 = arith.cmpf olt, %650, %611 : vector<1x256xf32>
    %c15_i32 = arith.constant 15 : i32
    %652 = vector.broadcast %c15_i32 : i32 to vector<1x256xi32>
    %653 = arith.select %651, %652, %613 : vector<1x256xi1>, vector<1x256xi32>
    %c15_273 = arith.constant 15 : index
    %c0_274 = arith.constant 0 : index
    %654 = memref.load %arg2[%c15_273, %c0_274] : memref<16x4xf32, #tpu.memory_space<smem>>
    %655 = vector.broadcast %654 : f32 to vector<1x256xf32>
    %656 = arith.select %651, %655, %616 : vector<1x256xi1>, vector<1x256xf32>
    %c15_275 = arith.constant 15 : index
    %c1_276 = arith.constant 1 : index
    %657 = memref.load %arg2[%c15_275, %c1_276] : memref<16x4xf32, #tpu.memory_space<smem>>
    %658 = vector.broadcast %657 : f32 to vector<1x256xf32>
    %659 = arith.select %651, %658, %619 : vector<1x256xi1>, vector<1x256xf32>
    %c15_277 = arith.constant 15 : index
    %c2_278 = arith.constant 2 : index
    %660 = memref.load %arg2[%c15_277, %c2_278] : memref<16x4xf32, #tpu.memory_space<smem>>
    %661 = vector.broadcast %660 : f32 to vector<1x256xf32>
    %662 = arith.select %651, %661, %622 : vector<1x256xi1>, vector<1x256xf32>
    %c15_279 = arith.constant 15 : index
    %c3_280 = arith.constant 3 : index
    %663 = memref.load %arg2[%c15_279, %c3_280] : memref<16x4xf32, #tpu.memory_space<smem>>
    %664 = vector.broadcast %663 : f32 to vector<1x256xf32>
    %665 = arith.select %651, %664, %625 : vector<1x256xi1>, vector<1x256xf32>
    %666 = vector.shape_cast %653 : vector<1x256xi32> to vector<1x1x256xi32>
    %c0_281 = arith.constant 0 : index
    %c0_282 = arith.constant 0 : index
    %c0_283 = arith.constant 0 : index
    %667 = vector.load %arg5[%c0_281, %c0_282, %c0_283] : memref<1x1x256xi32, #tpu.memory_space<vmem>>, vector<1x1x256xi32>
    tpu.vector_store %arg5[%c0_281, %c0_282, %c0_283], %666 {strides = array<i32>} : memref<1x1x256xi32, #tpu.memory_space<vmem>>, vector<1x1x256xi32>,
    %668 = tpu.concatenate %656, %659, %662, %665 in 0 : vector<1x256xf32>, vector<1x256xf32>, vector<1x256xf32>, vector<1x256xf32> -> vector<4x256xf32>
    %669 = vector.shape_cast %668 : vector<4x256xf32> to vector<1x4x256xf32>
    %c0_284 = arith.constant 0 : index
    %c0_285 = arith.constant 0 : index
    %c0_286 = arith.constant 0 : index
    %670 = vector.load %arg6[%c0_284, %c0_285, %c0_286] : memref<1x4x256xf32, #tpu.memory_space<vmem>>, vector<1x4x256xf32>
    tpu.vector_store %arg6[%c0_284, %c0_285, %c0_286], %669 {strides = array<i32>} : memref<1x4x256xf32, #tpu.memory_space<vmem>>, vector<1x4x256xf32>,
    return
  }
  func.func @transform_0(%arg0: i32, %arg1: i32) -> (i32, i32) {
    %c0_i32 = arith.constant 0 : i32
    %c0_i32_0 = arith.constant 0 : i32
    %c0_i32_1 = arith.constant 0 : i32
    return %c0_i32, %c0_i32_0 : i32, i32
  }
  func.func @transform_1(%arg0: i32, %arg1: i32) -> i32 {
    %c0_i32 = arith.constant 0 : i32
    %c0_i32_0 = arith.constant 0 : i32
    return %c0_i32 : i32
  }
  func.func @transform_2(%arg0: i32, %arg1: i32) -> (i32, i32, i32) {
    %c0_i32 = arith.constant 0 : i32
    %c0_i32_0 = arith.constant 0 : i32
    return %arg0, %c0_i32, %arg1 : i32, i32, i32
  }
  func.func @transform_3(%arg0: i32, %arg1: i32) -> (i32, i32, i32) {
    %c0_i32 = arith.constant 0 : i32
    %c0_i32_0 = arith.constant 0 : i32
    return %arg0, %c0_i32, %arg1 : i32, i32, i32
  }
  func.func @transform_4(%arg0: i32, %arg1: i32) -> (i32, i32, i32) {
    %c0_i32 = arith.constant 0 : i32
    %c0_i32_0 = arith.constant 0 : i32
    return %arg0, %c0_i32, %arg1 : i32, i32, i32
  }
}

</mosaic_0001>

<llo_original>
// kernel: tpu_custom_call.1
$region0: #{tpu_custom_call.1}
  #allocation0 [shape = 'u32[]', space=smem, size = 0x4, offset = 0x4, fixed_abs, tag = 'smem constant byte address 0x4 - core index']
  #allocation1 [shape = 'u32[72,128]{1,0:T(1,128)}', space=vmem, size = 0x9000, scoped, tag = 'internal scratch']
  %s0 = inlined_call_operand.vmem [shape: f32[16,4], index: 0, kind: input, shape index: {}]
  %s1 = inlined_call_operand.vmem [shape: f32[16], index: 1, kind: input, shape index: {}]
  %s2 = inlined_call_operand.vmem [shape: f32[2,4,256], index: 2, kind: input, shape index: {}]
  %s3 = inlined_call_operand.hbm [shape: s32[2,1,256], index: 3, kind: output, shape index: {0}]
  %s4 = inlined_call_operand.hbm [shape: f32[2,4,256], index: 4, kind: output, shape index: {1}]
  %5 = xla_tuple %s3, %s4
  %s6 = sld [smem:[#allocation0]]
  $region61: #{tpu_custom_call.1} parent=0
    _
  %s8 = ssub.s32 1, %s6
  %s9 = scalar_select 0, %s8, %s6
  $region1: #{tpu_custom_call.1} parent=0
    #allocation2 [shape = 'u8[8192]{0}', space=smem, size = 0x2000, scoped, tag = 'input window, operand 0, single buffered']
    #allocation3 [shape = 's32[2]{0}', space=sflag, size = 0x8, scoped, tag = 'scoped memory for tpu_custom_call.1']
    #allocation4 [shape = 's32[2]{0}', space=sflag, size = 0x8, scoped, tag = 'scoped memory for tpu_custom_call.1']
    #allocation5 [shape = 'u8[512]{0}', space=smem, size = 0x200, scoped, tag = 'input window, operand 1, single buffered']
    #allocation6 [shape = 's32[1]{0}', space=sflag, size = 0x4, scoped, tag = 'scoped memory for tpu_custom_call.1']
    #allocation7 [shape = 'u8[2048]{0}', space=vmem, size = 0x800, scoped, tag = 'output window, operand 0']
    #allocation8 [shape = 'u8[8192]{0}', space=vmem, size = 0x2000, scoped, tag = 'output window, operand 1']
    #allocation9 [shape = 's32[2]{0}', space=sflag, size = 0x8, scoped, tag = 'scoped memory for tpu_custom_call.1']
    %10 = vsyncpa [#allocation4], 0
    %11 = vsyncpa [#allocation6], 0
    %12 = vsyncpa [#allocation3], 0
    %s13 = scalar_lea.sflag [#allocation3], 1
    %14 = vsyncpa %s13, 0
    %15 = vsyncpa [#allocation9], 0
    %s16 = scalar_lea.sflag [#allocation9], 1
    %17 = vsyncpa %s16, 0
    loop: start=0, step=1, limit=4
    $region2: #{tpu_custom_call.1} parent=1 // loop_pre_header
      _
    $region3: #{tpu_custom_call.1} parent=1 // loop_header
      %s19 = sphi 0, %s23
      %p20 = scmp.ge.s32.totalorder %s19, 4
      %s26 = sphi 0, %s38
      %s27 = sphi 0, %s34
      %s28 = sphi 0, %s26
      %s29 = sphi 0, %s27
      %s30 = sphi 0, %s28
      %s31 = sphi 0, %s29
      %s39 = sphi 0, %s39
      %s41 = sphi 0, %s39
      %s42 = sphi 0, %s41
      %s56 = sphi 0, %s42
      %s60 = sphi 0, %s60
      %s62 = sphi 0, %s60
      %s63 = sphi 0, %s62
      %s77 = sphi 0, %s63
      %s85 = sphi 0, %s87
      %s88 = sphi 0, %s85
      %s89 = sphi 0, %s88
      %s105 = sphi 0, %s89
      %s113 = sphi 0, %s115
      %s116 = sphi 0, %s113
      %s117 = sphi 0, %s116
      %s133 = sphi 0, %s117
      %s141 = sphi 0, %s143
      %s144 = sphi 0, %s141
      %s145 = sphi 0, %s144
      %s161 = sphi 0, %s145
    $region4: #{tpu_custom_call.1} parent=1 // loop_header_branch
      %22 = sbr.rel (%p20) target = $region8
    $region5: #{tpu_custom_call.1} parent=1 // loop_body
      %s24 = ssub.s32 %s19, 1
      %s25 = ssub.s32 %s19, 2
      %s32 = sadd.s32 1, %s27
      %p33 = scmp.ge.s32.totalorder %s32, 1
      %s34 = scalar_select %p33, 0, %s32
      %s35 = sadd.s32 1, %s26
      %s36 = scalar_select %p33, %s35, %s26
      %p37 = scmp.ge.s32.totalorder %s36, 2
      %s38 = scalar_select %p37, 0, %s36
      %s40 = sadd.s32 %s39, 1
      %p43 = scmp.eq.s32.totalorder %s19, 1
      %p44 = scmp.ne.s32.totalorder %s39, %s41
      %p45 = scmp.eq.s32.totalorder %s19, 0
      %p46 = por %p44, %p45
      %p47 = scmp.ne.s32.totalorder %s39, %s41
      %p48 = scmp.eq.s32.totalorder %s24, 1
      %p49 = por %p47, %p48
      %p50 = scmp.ne.s32.totalorder %s41, %s42
      %p51 = scmp.eq.s32.totalorder %s24, 0
      %p52 = por %p50, %p51
      %p53 = scmp.ne.s32.totalorder %s41, %s42
      %p54 = scmp.eq.s32.totalorder %s25, 1
      %p55 = por %p53, %p54
      %p57 = scmp.ne.s32.totalorder %s42, %s56
      %p58 = scmp.eq.s32.totalorder %s25, 0
      %p59 = por %p57, %p58
      %s61 = sadd.s32 %s60, 1
      %p64 = scmp.eq.s32.totalorder %s19, 1
      %p65 = scmp.ne.s32.totalorder %s60, %s62
      %p66 = scmp.eq.s32.totalorder %s19, 0
      %p67 = por %p65, %p66
      %p68 = scmp.ne.s32.totalorder %s60, %s62
      %p69 = scmp.eq.s32.totalorder %s24, 1
      %p70 = por %p68, %p69
      %p71 = scmp.ne.s32.totalorder %s62, %s63
      %p72 = scmp.eq.s32.totalorder %s24, 0
      %p73 = por %p71, %p72
      %p74 = scmp.ne.s32.totalorder %s62, %s63
      %p75 = scmp.eq.s32.totalorder %s25, 1
      %p76 = por %p74, %p75
      %p78 = scmp.ne.s32.totalorder %s63, %s77
      %p79 = scmp.eq.s32.totalorder %s25, 0
      %p80 = por %p78, %p79
      %s81 = ssub.s32 %s26, %s38
      %s82 = ssub.s32 %s27, %s34
      %s83 = sor.u32 %s81, %s82
      %p84 = scmp.eq.s32.totalorder %s83, 0
      %s86 = sadd.s32 %s85, 1
      %s87 = scalar_select %p84, %s85, %s86
      %p90 = pneg %p84
      %p91 = scmp.eq.s32.totalorder %s19, 1
      %p92 = por %p90, %p91
      %p93 = scmp.ne.s32.totalorder %s85, %s88
      %p94 = scmp.eq.s32.totalorder %s19, 0
      %p95 = por %p93, %p94
      %p96 = scmp.ne.s32.totalorder %s85, %s88
      %p97 = scmp.eq.s32.totalorder %s24, 1
      %p98 = por %p96, %p97
      %p99 = scmp.ne.s32.totalorder %s88, %s89
      %p100 = scmp.eq.s32.totalorder %s24, 0
      %p101 = por %p99, %p100
      %p102 = scmp.ne.s32.totalorder %s88, %s89
      %p103 = scmp.eq.s32.totalorder %s25, 1
      %p104 = por %p102, %p103
      %p106 = scmp.ne.s32.totalorder %s89, %s105
      %p107 = scmp.eq.s32.totalorder %s25, 0
      %p108 = por %p106, %p107
      %s109 = ssub.s32 %s26, %s38
      %s110 = ssub.s32 %s27, %s34
      %s111 = sor.u32 %s109, %s110
      %p112 = scmp.eq.s32.totalorder %s111, 0
      %s114 = sadd.s32 %s113, 1
      %s115 = scalar_select %p112, %s113, %s114
      %p118 = pneg %p112
      %p119 = scmp.eq.s32.totalorder %s19, 1
      %p120 = por %p118, %p119
      %p121 = scmp.ne.s32.totalorder %s113, %s116
      %p122 = scmp.eq.s32.totalorder %s19, 0
      %p123 = por %p121, %p122
      %p124 = scmp.ne.s32.totalorder %s113, %s116
      %p125 = scmp.eq.s32.totalorder %s24, 1
      %p126 = por %p124, %p125
      %p127 = scmp.ne.s32.totalorder %s116, %s117
      %p128 = scmp.eq.s32.totalorder %s24, 0
      %p129 = por %p127, %p128
      %p130 = scmp.ne.s32.totalorder %s116, %s117
      %p131 = scmp.eq.s32.totalorder %s25, 1
      %p132 = por %p130, %p131
      %p134 = scmp.ne.s32.totalorder %s117, %s133
      %p135 = scmp.eq.s32.totalorder %s25, 0
      %p136 = por %p134, %p135
      %s137 = ssub.s32 %s26, %s38
      %s138 = ssub.s32 %s27, %s34
      %s139 = sor.u32 %s137, %s138
      %p140 = scmp.eq.s32.totalorder %s139, 0
      %s142 = sadd.s32 %s141, 1
      %s143 = scalar_select %p140, %s141, %s142
      %p146 = pneg %p140
      %p147 = scmp.eq.s32.totalorder %s19, 1
      %p148 = por %p146, %p147
      %p149 = scmp.ne.s32.totalorder %s141, %s144
      %p150 = scmp.eq.s32.totalorder %s19, 0
      %p151 = por %p149, %p150
      %p152 = scmp.ne.s32.totalorder %s141, %s144
      %p153 = scmp.eq.s32.totalorder %s24, 1
      %p154 = por %p152, %p153
      %p155 = scmp.ne.s32.totalorder %s144, %s145
      %p156 = scmp.eq.s32.totalorder %s24, 0
      %p157 = por %p155, %p156
      %p158 = scmp.ne.s32.totalorder %s144, %s145
      %p159 = scmp.eq.s32.totalorder %s25, 1
      %p160 = por %p158, %p159
      %p162 = scmp.ne.s32.totalorder %s145, %s161
      %p163 = scmp.eq.s32.totalorder %s25, 0
      %p164 = por %p162, %p163
      %p165 = scmp.le.s32.totalorder 1, %s19
      %p166 = scmp.lt.s32.totalorder %s19, 3
      %p167 = pnand %p165, %p166
      %p168 = pneg %p167
      // Predicated region
      $region9: #{tpu_custom_call.1} parent=5 // pred_check
        _
      $region10: #{tpu_custom_call.1} parent=5 // pred_check_branch
        %170 = sbr.rel (%p167) target = $region12
      $region11: #{tpu_custom_call.1} parent=5 // pred_region
        %s171 = ssub.s32 %s19, 1
        // Predicated region
        $region13: #{tpu_custom_call.1} parent=11 // pred_check
          %p172 = pneg %p52
        $region14: #{tpu_custom_call.1} parent=11 // pred_check_branch
          %174 = sbr.rel (%p172) target = $region16
        $region15: #{tpu_custom_call.1} parent=11 // pred_region
          %176 = vsyncadd [#allocation4], 0
          %s177 = sshll.u32 %s0, 4
          %s178 = int_to_ptr.vmem [resolvable:$true] %s177
          %183 = dma.vmem_to_smem %s178, 256, [#allocation2], [#allocation4], 128, 128, 8
        $region16: #{tpu_custom_call.1} parent=11 // pred_fallthru
          _
        // Predicated region
        $region17: #{tpu_custom_call.1} parent=11 // pred_check
          %p184 = pneg %p73
        $region18: #{tpu_custom_call.1} parent=11 // pred_check_branch
          %186 = sbr.rel (%p184) target = $region20
        $region19: #{tpu_custom_call.1} parent=11 // pred_region
          %188 = vsyncadd [#allocation6], 0
          %s190 = sshll.u32 %s1, 4
          %s191 = int_to_ptr.vmem [resolvable:$true] %s190
          %193 = dma.vmem_to_smem %s191, 16, [#allocation5], [#allocation6]
        $region20: #{tpu_custom_call.1} parent=11 // pred_fallthru
          _
      $region12: #{tpu_custom_call.1} parent=5 // pred_fallthru
        _
      %p194 = scmp.lt.s32.totalorder %s19, 2
      // Predicated region
      $region21: #{tpu_custom_call.1} parent=5 // pred_check
        %p195 = pneg %p194
      $region22: #{tpu_custom_call.1} parent=5 // pred_check_branch
        %197 = sbr.rel (%p195) target = $region24
      $region23: #{tpu_custom_call.1} parent=5 // pred_region
        // Predicated region
        $region25: #{tpu_custom_call.1} parent=23 // pred_check
          %p198 = pneg %p95
        $region26: #{tpu_custom_call.1} parent=23 // pred_check_branch
          %200 = sbr.rel (%p198) target = $region28
        $region27: #{tpu_custom_call.1} parent=23 // pred_region
          %s201 = smul.u32 2, %s27
          %p202 = scmp.lt.s32.totalorder %s26, 1
          %s203 = scalar_select %p202, %s26, 1
          %p204 = scmp.lt.s32.totalorder %s201, 1
          %s205 = scalar_select %p204, %s201, 1
          %s206 = smul.addr %s203, 2
          %s207 = sadd.s32 %s205, %s206
          %s208 = smul.addr %s207, 4
          %s209 = scalar_lea.vmem %s2, %s208
          %s210 = smul.u32 2, %s27
        $region28: #{tpu_custom_call.1} parent=23 // pred_fallthru
          _
      $region24: #{tpu_custom_call.1} parent=5 // pred_fallthru
        _
      %p211 = scmp.le.s32.totalorder 1, %s19
      %p212 = scmp.lt.s32.totalorder %s19, 3
      %p213 = pnand %p211, %p212
      %p214 = pneg %p213
      // Predicated region
      $region29: #{tpu_custom_call.1} parent=5 // pred_check
        _
      $region30: #{tpu_custom_call.1} parent=5 // pred_check_branch
        %216 = sbr.rel (%p213) target = $region32
      $region31: #{tpu_custom_call.1} parent=5 // pred_region
        %s217 = ssub.s32 %s19, 1
        // Predicated region
        $region33: #{tpu_custom_call.1} parent=31 // pred_check
          %p218 = pneg %p52
        $region34: #{tpu_custom_call.1} parent=31 // pred_check_branch
          %220 = sbr.rel (%p218) target = $region36
        $region35: #{tpu_custom_call.1} parent=31 // pred_region
          %222 = dma.done [#allocation4], 256
        $region36: #{tpu_custom_call.1} parent=31 // pred_fallthru
          _
        // Predicated region
        $region37: #{tpu_custom_call.1} parent=31 // pred_check
          %p223 = pneg %p73
        $region38: #{tpu_custom_call.1} parent=31 // pred_check_branch
          %225 = sbr.rel (%p223) target = $region40
        $region39: #{tpu_custom_call.1} parent=31 // pred_region
          %227 = dma.done [#allocation6], 16
        $region40: #{tpu_custom_call.1} parent=31 // pred_fallthru
          _
        %228 = sfence
        %p229 = pneg %p52
        %p230 = pneg %p49
        %p231 = pneg %p73
        %p232 = pneg %p70
        %s233 = smul.u32 2, %s29
        %p234 = scmp.lt.s32.totalorder %s28, 1
        %s235 = scalar_select %p234, %s28, 1
        %p236 = scmp.lt.s32.totalorder %s233, 1
        %s237 = scalar_select %p236, %s233, 1
        %s238 = smul.addr %s235, 2
        %s239 = sadd.s32 %s237, %s238
        %s240 = smul.addr %s239, 4
        %s241 = scalar_lea.vmem %s2, %s240
        %p242 = pneg %p101
        %p243 = pneg %p98
        %p244 = pneg %p129
        %p245 = pneg %p126
        %s246 = sand.u32 %s116, 1
        %s247 = scalar_lea.sflag [#allocation3], %s246
        %s248 = sand.u32 %s116, 1
        %s249 = smul.addr %s248, 2
        %s250 = scalar_lea.vmem [#allocation7], %s249
        %p251 = pneg %p157
        %p252 = pneg %p154
        %s253 = sand.u32 %s144, 1
        %s254 = scalar_lea.sflag [#allocation9], %s253
        %s255 = sand.u32 %s144, 1
        %s256 = smul.addr %s255, 8
        %s257 = scalar_lea.vmem [#allocation8], %s256
        %s258 = smul.u32 2, %s29
        %p259 = scmp.lt.s32.totalorder %s28, 1
        %s260 = scalar_select %p259, %s28, 1
        %p261 = scmp.lt.s32.totalorder %s258, 1
        %s262 = scalar_select %p261, %s258, 1
        %s263 = smul.addr %s260, 2
        %s264 = sadd.s32 %s262, %s263
        %s265 = smul.addr %s264, 4
        %s266 = scalar_lea.vmem %s2, %s265
        %s267 = smul.u32 2, %s29
        %s268 = smul.u32 2, %s29
        %s269 = smul.u32 2, %s29
        %v270 = vld [vmem:[%s266] sm:$0xff]
        %v271 = vmul.f32 %v270, %v270
        %273 = vst [vmem:[#allocation1] ss:$2 sm:$0xff] %v271
        %v274 = vld.sshfl [vmem:[#allocation1] sm:$0xff pattern:$0x75316420]
        %v275 = vld.sshfl [vmem:[#allocation1 + $0x8] sm:$0xff pattern:$0x75316420]
        %vm278 = vcmask 1043456
        %v279 = vsel %vm278, %v274, 0.0
        %v280 = vrot.slane %v279, 4
        %v281 = vadd.f32 %v279, %v280
        %v282 = vrot.slane %v281, 2
        %v283 = vadd.f32 %v281, %v282
        %v284 = vrot.slane %v283, 1
        %v285 = vadd.f32 %v283, %v284
        %v286 = vsel %vm278, %v275, 0.0
        %v287 = vrot.slane %v286, 4
        %v288 = vadd.f32 %v286, %v287
        %v289 = vrot.slane %v288, 2
        %v290 = vadd.f32 %v288, %v289
        %v291 = vrot.slane %v290, 1
        %v292 = vadd.f32 %v290, %v291
        %s293 = sld [smem:[#allocation2]]
        %v294 = vstv %s293
        %v295 = vmul.f32 %v294, %v270
        %s296 = sld [smem:[#allocation2 + $0x1]]
        %v297 = vstv %s296
        %v298 = vmul.f32 %v297, %v270
        %v300 = vrot.slane %v298, 5
        %v301 = vrot.slane %v300, 4
        %v303 = vadd.f32 %v295, %v301
        %s304 = sld [smem:[#allocation2 + $0x2]]
        %v305 = vstv %s304
        %v306 = vmul.f32 %v305, %v270
        %v308 = vrot.slane %v306, 6
        %v309 = vrot.slane %v308, 4
        %v311 = vadd.f32 %v303, %v309
        %s312 = sld [smem:[#allocation2 + $0x3]]
        %v313 = vstv %s312
        %v314 = vmul.f32 %v313, %v270
        %v316 = vrot.slane %v314, 7
        %v317 = vrot.slane %v316, 4
        %v319 = vadd.f32 %v311, %v317
        %s320 = sld [smem:[#allocation5]]
        %v321 = vstv %s320
        %v322 = vadd.f32 %v285, %v321
        %v323 = vadd.f32 %v292, %v321
        %v324 = vmul.f32 %v319, 2.0
        %v326 = vperm.slane %v324, 0
        %v327 = vperm.slane %v324, 4
        %v330 = vsub.f32 %v322, %v326
        %v331 = vsub.f32 %v323, %v327
        %vm332 = vcmp.lt.f32.partialorder %v330, inf
        %vm333 = vcmp.lt.f32.partialorder %v331, inf
        %v334 = vsel %vm332, %v330, inf
        %v335 = vsel %vm333, %v331, inf
        %v336 = vsel %vm332, %v294, 0.0
        %v337 = vsel %vm333, %v294, 0.0
        %v338 = vsel %vm332, %v297, 0.0
        %v339 = vsel %vm333, %v297, 0.0
        %v340 = vsel %vm332, %v305, 0.0
        %v341 = vsel %vm333, %v305, 0.0
        %v342 = vsel %vm332, %v313, 0.0
        %v343 = vsel %vm333, %v313, 0.0
        %s344 = sld [smem:[#allocation2 + $0x80]]
        %v345 = vstv %s344
        %v346 = vmul.f32 %v345, %v270
        %s347 = sld [smem:[#allocation2 + $0x81]]
        %v348 = vstv %s347
        %v349 = vmul.f32 %v348, %v270
        %v351 = vrot.slane %v349, 5
        %v352 = vrot.slane %v351, 4
        %v354 = vadd.f32 %v346, %v352
        %s355 = sld [smem:[#allocation2 + $0x82]]
        %v356 = vstv %s355
        %v357 = vmul.f32 %v356, %v270
        %v359 = vrot.slane %v357, 6
        %v360 = vrot.slane %v359, 4
        %v362 = vadd.f32 %v354, %v360
        %s363 = sld [smem:[#allocation2 + $0x83]]
        %v364 = vstv %s363
        %v365 = vmul.f32 %v364, %v270
        %v367 = vrot.slane %v365, 7
        %v368 = vrot.slane %v367, 4
        %v370 = vadd.f32 %v362, %v368
        %s371 = sld [smem:[#allocation5 + $0x1]]
        %v372 = vstv %s371
        %v373 = vadd.f32 %v285, %v372
        %v374 = vadd.f32 %v292, %v372
        %v375 = vmul.f32 %v370, 2.0
        %v377 = vperm.slane %v375, 0
        %v378 = vperm.slane %v375, 4
        %v381 = vsub.f32 %v373, %v377
        %v382 = vsub.f32 %v374, %v378
        %vm383 = vcmp.lt.f32.partialorder %v381, %v334
        %vm384 = vcmp.lt.f32.partialorder %v382, %v335
        %v385 = vsel %vm383, %v381, %v334
        %v386 = vsel %vm384, %v382, %v335
        %v387 = vsel %vm383, 1, 0
        %v388 = vsel %vm384, 1, 0
        %v389 = vsel %vm383, %v345, %v336
        %v390 = vsel %vm384, %v345, %v337
        %v391 = vsel %vm383, %v348, %v338
        %v392 = vsel %vm384, %v348, %v339
        %v393 = vsel %vm383, %v356, %v340
        %v394 = vsel %vm384, %v356, %v341
        %v395 = vsel %vm383, %v364, %v342
        %v396 = vsel %vm384, %v364, %v343
        %s397 = sld [smem:[#allocation2 + $0x100]]
        %v398 = vstv %s397
        %v399 = vmul.f32 %v398, %v270
        %s400 = sld [smem:[#allocation2 + $0x101]]
        %v401 = vstv %s400
        %v402 = vmul.f32 %v401, %v270
        %v404 = vrot.slane %v402, 5
        %v405 = vrot.slane %v404, 4
        %v407 = vadd.f32 %v399, %v405
        %s408 = sld [smem:[#allocation2 + $0x102]]
        %v409 = vstv %s408
        %v410 = vmul.f32 %v409, %v270
        %v412 = vrot.slane %v410, 6
        %v413 = vrot.slane %v412, 4
        %v415 = vadd.f32 %v407, %v413
        %s416 = sld [smem:[#allocation2 + $0x103]]
        %v417 = vstv %s416
        %v418 = vmul.f32 %v417, %v270
        %v420 = vrot.slane %v418, 7
        %v421 = vrot.slane %v420, 4
        %v423 = vadd.f32 %v415, %v421
        %s424 = sld [smem:[#allocation5 + $0x2]]
        %v425 = vstv %s424
        %v426 = vadd.f32 %v285, %v425
        %v427 = vadd.f32 %v292, %v425
        %v428 = vmul.f32 %v423, 2.0
        %v430 = vperm.slane %v428, 0
        %v431 = vperm.slane %v428, 4
        %v434 = vsub.f32 %v426, %v430
        %v435 = vsub.f32 %v427, %v431
        %vm436 = vcmp.lt.f32.partialorder %v434, %v385
        %vm437 = vcmp.lt.f32.partialorder %v435, %v386
        %v438 = vsel %vm436, %v434, %v385
        %v439 = vsel %vm437, %v435, %v386
        %v440 = vsel %vm436, 2, %v387
        %v441 = vsel %vm437, 2, %v388
        %v442 = vsel %vm436, %v398, %v389
        %v443 = vsel %vm437, %v398, %v390
        %v444 = vsel %vm436, %v401, %v391
        %v445 = vsel %vm437, %v401, %v392
        %v446 = vsel %vm436, %v409, %v393
        %v447 = vsel %vm437, %v409, %v394
        %v448 = vsel %vm436, %v417, %v395
        %v449 = vsel %vm437, %v417, %v396
        %s450 = sld [smem:[#allocation2 + $0x180]]
        %v451 = vstv %s450
        %v452 = vmul.f32 %v451, %v270
        %s453 = sld [smem:[#allocation2 + $0x181]]
        %v454 = vstv %s453
        %v455 = vmul.f32 %v454, %v270
        %v457 = vrot.slane %v455, 5
        %v458 = vrot.slane %v457, 4
        %v460 = vadd.f32 %v452, %v458
        %s461 = sld [smem:[#allocation2 + $0x182]]
        %v462 = vstv %s461
        %v463 = vmul.f32 %v462, %v270
        %v465 = vrot.slane %v463, 6
        %v466 = vrot.slane %v465, 4
        %v468 = vadd.f32 %v460, %v466
        %s469 = sld [smem:[#allocation2 + $0x183]]
        %v470 = vstv %s469
        %v471 = vmul.f32 %v470, %v270
        %v473 = vrot.slane %v471, 7
        %v474 = vrot.slane %v473, 4
        %v476 = vadd.f32 %v468, %v474
        %s477 = sld [smem:[#allocation5 + $0x3]]
        %v478 = vstv %s477
        %v479 = vadd.f32 %v285, %v478
        %v480 = vadd.f32 %v292, %v478
        %v481 = vmul.f32 %v476, 2.0
        %v483 = vperm.slane %v481, 0
        %v484 = vperm.slane %v481, 4
        %v487 = vsub.f32 %v479, %v483
        %v488 = vsub.f32 %v480, %v484
        %vm489 = vcmp.lt.f32.partialorder %v487, %v438
        %vm490 = vcmp.lt.f32.partialorder %v488, %v439
        %v491 = vsel %vm489, %v487, %v438
        %v492 = vsel %vm490, %v488, %v439
        %v493 = vsel %vm489, 3, %v440
        %v494 = vsel %vm490, 3, %v441
        %v495 = vsel %vm489, %v451, %v442
        %v496 = vsel %vm490, %v451, %v443
        %v497 = vsel %vm489, %v454, %v444
        %v498 = vsel %vm490, %v454, %v445
        %v499 = vsel %vm489, %v462, %v446
        %v500 = vsel %vm490, %v462, %v447
        %v501 = vsel %vm489, %v470, %v448
        %v502 = vsel %vm490, %v470, %v449
        %s503 = sld [smem:[#allocation2 + $0x200]]
        %v504 = vstv %s503
        %v505 = vmul.f32 %v504, %v270
        %s506 = sld [smem:[#allocation2 + $0x201]]
        %v507 = vstv %s506
        %v508 = vmul.f32 %v507, %v270
        %v510 = vrot.slane %v508, 5
        %v511 = vrot.slane %v510, 4
        %v513 = vadd.f32 %v505, %v511
        %s514 = sld [smem:[#allocation2 + $0x202]]
        %v515 = vstv %s514
        %v516 = vmul.f32 %v515, %v270
        %v518 = vrot.slane %v516, 6
        %v519 = vrot.slane %v518, 4
        %v521 = vadd.f32 %v513, %v519
        %s522 = sld [smem:[#allocation2 + $0x203]]
        %v523 = vstv %s522
        %v524 = vmul.f32 %v523, %v270
        %v526 = vrot.slane %v524, 7
        %v527 = vrot.slane %v526, 4
        %v529 = vadd.f32 %v521, %v527
        %s530 = sld [smem:[#allocation5 + $0x4]]
        %v531 = vstv %s530
        %v532 = vadd.f32 %v285, %v531
        %v533 = vadd.f32 %v292, %v531
        %v534 = vmul.f32 %v529, 2.0
        %v536 = vperm.slane %v534, 0
        %v537 = vperm.slane %v534, 4
        %v540 = vsub.f32 %v532, %v536
        %v541 = vsub.f32 %v533, %v537
        %vm542 = vcmp.lt.f32.partialorder %v540, %v491
        %vm543 = vcmp.lt.f32.partialorder %v541, %v492
        %v544 = vsel %vm542, %v540, %v491
        %v545 = vsel %vm543, %v541, %v492
        %v546 = vsel %vm542, 4, %v493
        %v547 = vsel %vm543, 4, %v494
        %v548 = vsel %vm542, %v504, %v495
        %v549 = vsel %vm543, %v504, %v496
        %v550 = vsel %vm542, %v507, %v497
        %v551 = vsel %vm543, %v507, %v498
        %v552 = vsel %vm542, %v515, %v499
        %v553 = vsel %vm543, %v515, %v500
        %v554 = vsel %vm542, %v523, %v501
        %v555 = vsel %vm543, %v523, %v502
        %s556 = sld [smem:[#allocation2 + $0x280]]
        %v557 = vstv %s556
        %v558 = vmul.f32 %v557, %v270
        %s559 = sld [smem:[#allocation2 + $0x281]]
        %v560 = vstv %s559
        %v561 = vmul.f32 %v560, %v270
        %v563 = vrot.slane %v561, 5
        %v564 = vrot.slane %v563, 4
        %v566 = vadd.f32 %v558, %v564
        %s567 = sld [smem:[#allocation2 + $0x282]]
        %v568 = vstv %s567
        %v569 = vmul.f32 %v568, %v270
        %v571 = vrot.slane %v569, 6
        %v572 = vrot.slane %v571, 4
        %v574 = vadd.f32 %v566, %v572
        %s575 = sld [smem:[#allocation2 + $0x283]]
        %v576 = vstv %s575
        %v577 = vmul.f32 %v576, %v270
        %v579 = vrot.slane %v577, 7
        %v580 = vrot.slane %v579, 4
        %v582 = vadd.f32 %v574, %v580
        %s583 = sld [smem:[#allocation5 + $0x5]]
        %v584 = vstv %s583
        %v585 = vadd.f32 %v285, %v584
        %v586 = vadd.f32 %v292, %v584
        %v587 = vmul.f32 %v582, 2.0
        %v589 = vperm.slane %v587, 0
        %v590 = vperm.slane %v587, 4
        %v593 = vsub.f32 %v585, %v589
        %v594 = vsub.f32 %v586, %v590
        %vm595 = vcmp.lt.f32.partialorder %v593, %v544
        %vm596 = vcmp.lt.f32.partialorder %v594, %v545
        %v597 = vsel %vm595, %v593, %v544
        %v598 = vsel %vm596, %v594, %v545
        %v599 = vsel %vm595, 5, %v546
        %v600 = vsel %vm596, 5, %v547
        %v601 = vsel %vm595, %v557, %v548
        %v602 = vsel %vm596, %v557, %v549
        %v603 = vsel %vm595, %v560, %v550
        %v604 = vsel %vm596, %v560, %v551
        %v605 = vsel %vm595, %v568, %v552
        %v606 = vsel %vm596, %v568, %v553
        %v607 = vsel %vm595, %v576, %v554
        %v608 = vsel %vm596, %v576, %v555
        %s609 = sld [smem:[#allocation2 + $0x300]]
        %v610 = vstv %s609
        %v611 = vmul.f32 %v610, %v270
        %s612 = sld [smem:[#allocation2 + $0x301]]
        %v613 = vstv %s612
        %v614 = vmul.f32 %v613, %v270
        %v616 = vrot.slane %v614, 5
        %v617 = vrot.slane %v616, 4
        %v619 = vadd.f32 %v611, %v617
        %s620 = sld [smem:[#allocation2 + $0x302]]
        %v621 = vstv %s620
        %v622 = vmul.f32 %v621, %v270
        %v624 = vrot.slane %v622, 6
        %v625 = vrot.slane %v624, 4
        %v627 = vadd.f32 %v619, %v625
        %s628 = sld [smem:[#allocation2 + $0x303]]
        %v629 = vstv %s628
        %v630 = vmul.f32 %v629, %v270
        %v632 = vrot.slane %v630, 7
        %v633 = vrot.slane %v632, 4
        %v635 = vadd.f32 %v627, %v633
        %s636 = sld [smem:[#allocation5 + $0x6]]
        %v637 = vstv %s636
        %v638 = vadd.f32 %v285, %v637
        %v639 = vadd.f32 %v292, %v637
        %v640 = vmul.f32 %v635, 2.0
        %v642 = vperm.slane %v640, 0
        %v643 = vperm.slane %v640, 4
        %v646 = vsub.f32 %v638, %v642
        %v647 = vsub.f32 %v639, %v643
        %vm648 = vcmp.lt.f32.partialorder %v646, %v597
        %vm649 = vcmp.lt.f32.partialorder %v647, %v598
        %v650 = vsel %vm648, %v646, %v597
        %v651 = vsel %vm649, %v647, %v598
        %v652 = vsel %vm648, 6, %v599
        %v653 = vsel %vm649, 6, %v600
        %v654 = vsel %vm648, %v610, %v601
        %v655 = vsel %vm649, %v610, %v602
        %v656 = vsel %vm648, %v613, %v603
        %v657 = vsel %vm649, %v613, %v604
        %v658 = vsel %vm648, %v621, %v605
        %v659 = vsel %vm649, %v621, %v606
        %v660 = vsel %vm648, %v629, %v607
        %v661 = vsel %vm649, %v629, %v608
        %s662 = sld [smem:[#allocation2 + $0x380]]
        %v663 = vstv %s662
        %v664 = vmul.f32 %v663, %v270
        %s665 = sld [smem:[#allocation2 + $0x381]]
        %v666 = vstv %s665
        %v667 = vmul.f32 %v666, %v270
        %v669 = vrot.slane %v667, 5
        %v670 = vrot.slane %v669, 4
        %v672 = vadd.f32 %v664, %v670
        %s673 = sld [smem:[#allocation2 + $0x382]]
        %v674 = vstv %s673
        %v675 = vmul.f32 %v674, %v270
        %v677 = vrot.slane %v675, 6
        %v678 = vrot.slane %v677, 4
        %v680 = vadd.f32 %v672, %v678
        %s681 = sld [smem:[#allocation2 + $0x383]]
        %v682 = vstv %s681
        %v683 = vmul.f32 %v682, %v270
        %v685 = vrot.slane %v683, 7
        %v686 = vrot.slane %v685, 4
        %v688 = vadd.f32 %v680, %v686
        %s689 = sld [smem:[#allocation5 + $0x7]]
        %v690 = vstv %s689
        %v691 = vadd.f32 %v285, %v690
        %v692 = vadd.f32 %v292, %v690
        %v693 = vmul.f32 %v688, 2.0
        %v695 = vperm.slane %v693, 0
        %v696 = vperm.slane %v693, 4
        %v699 = vsub.f32 %v691, %v695
        %v700 = vsub.f32 %v692, %v696
        %vm701 = vcmp.lt.f32.partialorder %v699, %v650
        %vm702 = vcmp.lt.f32.partialorder %v700, %v651
        %v703 = vsel %vm701, %v699, %v650
        %v704 = vsel %vm702, %v700, %v651
        %v705 = vsel %vm701, 7, %v652
        %v706 = vsel %vm702, 7, %v653
        %v707 = vsel %vm701, %v663, %v654
        %v708 = vsel %vm702, %v663, %v655
        %v709 = vsel %vm701, %v666, %v656
        %v710 = vsel %vm702, %v666, %v657
        %v711 = vsel %vm701, %v674, %v658
        %v712 = vsel %vm702, %v674, %v659
        %v713 = vsel %vm701, %v682, %v660
        %v714 = vsel %vm702, %v682, %v661
        %s715 = sld [smem:[#allocation2 + $0x400]]
        %v716 = vstv %s715
        %v717 = vmul.f32 %v716, %v270
        %s718 = sld [smem:[#allocation2 + $0x401]]
        %v719 = vstv %s718
        %v720 = vmul.f32 %v719, %v270
        %v722 = vrot.slane %v720, 5
        %v723 = vrot.slane %v722, 4
        %v725 = vadd.f32 %v717, %v723
        %s726 = sld [smem:[#allocation2 + $0x402]]
        %v727 = vstv %s726
        %v728 = vmul.f32 %v727, %v270
        %v730 = vrot.slane %v728, 6
        %v731 = vrot.slane %v730, 4
        %v733 = vadd.f32 %v725, %v731
        %s734 = sld [smem:[#allocation2 + $0x403]]
        %v735 = vstv %s734
        %v736 = vmul.f32 %v735, %v270
        %v738 = vrot.slane %v736, 7
        %v739 = vrot.slane %v738, 4
        %v741 = vadd.f32 %v733, %v739
        %s742 = sld [smem:[#allocation5 + $0x8]]
        %v743 = vstv %s742
        %v744 = vadd.f32 %v285, %v743
        %v745 = vadd.f32 %v292, %v743
        %v746 = vmul.f32 %v741, 2.0
        %v748 = vperm.slane %v746, 0
        %v749 = vperm.slane %v746, 4
        %v752 = vsub.f32 %v744, %v748
        %v753 = vsub.f32 %v745, %v749
        %vm754 = vcmp.lt.f32.partialorder %v752, %v703
        %vm755 = vcmp.lt.f32.partialorder %v753, %v704
        %v756 = vsel %vm754, %v752, %v703
        %v757 = vsel %vm755, %v753, %v704
        %v758 = vsel %vm754, 8, %v705
        %v759 = vsel %vm755, 8, %v706
        %v760 = vsel %vm754, %v716, %v707
        %v761 = vsel %vm755, %v716, %v708
        %v762 = vsel %vm754, %v719, %v709
        %v763 = vsel %vm755, %v719, %v710
        %v764 = vsel %vm754, %v727, %v711
        %v765 = vsel %vm755, %v727, %v712
        %v766 = vsel %vm754, %v735, %v713
        %v767 = vsel %vm755, %v735, %v714
        %s768 = sld [smem:[#allocation2 + $0x480]]
        %v769 = vstv %s768
        %v770 = vmul.f32 %v769, %v270
        %s771 = sld [smem:[#allocation2 + $0x481]]
        %v772 = vstv %s771
        %v773 = vmul.f32 %v772, %v270
        %v775 = vrot.slane %v773, 5
        %v776 = vrot.slane %v775, 4
        %v778 = vadd.f32 %v770, %v776
        %s779 = sld [smem:[#allocation2 + $0x482]]
        %v780 = vstv %s779
        %v781 = vmul.f32 %v780, %v270
        %v783 = vrot.slane %v781, 6
        %v784 = vrot.slane %v783, 4
        %v786 = vadd.f32 %v778, %v784
        %s787 = sld [smem:[#allocation2 + $0x483]]
        %v788 = vstv %s787
        %v789 = vmul.f32 %v788, %v270
        %v791 = vrot.slane %v789, 7
        %v792 = vrot.slane %v791, 4
        %v794 = vadd.f32 %v786, %v792
        %s795 = sld [smem:[#allocation5 + $0x9]]
        %v796 = vstv %s795
        %v797 = vadd.f32 %v285, %v796
        %v798 = vadd.f32 %v292, %v796
        %v799 = vmul.f32 %v794, 2.0
        %v801 = vperm.slane %v799, 0
        %v802 = vperm.slane %v799, 4
        %v805 = vsub.f32 %v797, %v801
        %v806 = vsub.f32 %v798, %v802
        %vm807 = vcmp.lt.f32.partialorder %v805, %v756
        %vm808 = vcmp.lt.f32.partialorder %v806, %v757
        %v809 = vsel %vm807, %v805, %v756
        %v810 = vsel %vm808, %v806, %v757
        %v811 = vsel %vm807, 9, %v758
        %v812 = vsel %vm808, 9, %v759
        %v813 = vsel %vm807, %v769, %v760
        %v814 = vsel %vm808, %v769, %v761
        %v815 = vsel %vm807, %v772, %v762
        %v816 = vsel %vm808, %v772, %v763
        %v817 = vsel %vm807, %v780, %v764
        %v818 = vsel %vm808, %v780, %v765
        %v819 = vsel %vm807, %v788, %v766
        %v820 = vsel %vm808, %v788, %v767
        %s821 = sld [smem:[#allocation2 + $0x500]]
        %v822 = vstv %s821
        %v823 = vmul.f32 %v822, %v270
        %s824 = sld [smem:[#allocation2 + $0x501]]
        %v825 = vstv %s824
        %v826 = vmul.f32 %v825, %v270
        %v828 = vrot.slane %v826, 5
        %v829 = vrot.slane %v828, 4
        %v831 = vadd.f32 %v823, %v829
        %s832 = sld [smem:[#allocation2 + $0x502]]
        %v833 = vstv %s832
        %v834 = vmul.f32 %v833, %v270
        %v836 = vrot.slane %v834, 6
        %v837 = vrot.slane %v836, 4
        %v839 = vadd.f32 %v831, %v837
        %s840 = sld [smem:[#allocation2 + $0x503]]
        %v841 = vstv %s840
        %v842 = vmul.f32 %v841, %v270
        %v844 = vrot.slane %v842, 7
        %v845 = vrot.slane %v844, 4
        %v847 = vadd.f32 %v839, %v845
        %s848 = sld [smem:[#allocation5 + $0xa]]
        %v849 = vstv %s848
        %v850 = vadd.f32 %v285, %v849
        %v851 = vadd.f32 %v292, %v849
        %v852 = vmul.f32 %v847, 2.0
        %v854 = vperm.slane %v852, 0
        %v855 = vperm.slane %v852, 4
        %v858 = vsub.f32 %v850, %v854
        %v859 = vsub.f32 %v851, %v855
        %vm860 = vcmp.lt.f32.partialorder %v858, %v809
        %vm861 = vcmp.lt.f32.partialorder %v859, %v810
        %v862 = vsel %vm860, %v858, %v809
        %v863 = vsel %vm861, %v859, %v810
        %v864 = vsel %vm860, 10, %v811
        %v865 = vsel %vm861, 10, %v812
        %v866 = vsel %vm860, %v822, %v813
        %v867 = vsel %vm861, %v822, %v814
        %v868 = vsel %vm860, %v825, %v815
        %v869 = vsel %vm861, %v825, %v816
        %v870 = vsel %vm860, %v833, %v817
        %v871 = vsel %vm861, %v833, %v818
        %v872 = vsel %vm860, %v841, %v819
        %v873 = vsel %vm861, %v841, %v820
        %s874 = sld [smem:[#allocation2 + $0x580]]
        %v875 = vstv %s874
        %v876 = vmul.f32 %v875, %v270
        %s877 = sld [smem:[#allocation2 + $0x581]]
        %v878 = vstv %s877
        %v879 = vmul.f32 %v878, %v270
        %v881 = vrot.slane %v879, 5
        %v882 = vrot.slane %v881, 4
        %v884 = vadd.f32 %v876, %v882
        %s885 = sld [smem:[#allocation2 + $0x582]]
        %v886 = vstv %s885
        %v887 = vmul.f32 %v886, %v270
        %v889 = vrot.slane %v887, 6
        %v890 = vrot.slane %v889, 4
        %v892 = vadd.f32 %v884, %v890
        %s893 = sld [smem:[#allocation2 + $0x583]]
        %v894 = vstv %s893
        %v895 = vmul.f32 %v894, %v270
        %v897 = vrot.slane %v895, 7
        %v898 = vrot.slane %v897, 4
        %v900 = vadd.f32 %v892, %v898
        %s901 = sld [smem:[#allocation5 + $0xb]]
        %v902 = vstv %s901
        %v903 = vadd.f32 %v285, %v902
        %v904 = vadd.f32 %v292, %v902
        %v905 = vmul.f32 %v900, 2.0
        %v907 = vperm.slane %v905, 0
        %v908 = vperm.slane %v905, 4
        %v911 = vsub.f32 %v903, %v907
        %v912 = vsub.f32 %v904, %v908
        %vm913 = vcmp.lt.f32.partialorder %v911, %v862
        %vm914 = vcmp.lt.f32.partialorder %v912, %v863
        %v915 = vsel %vm913, %v911, %v862
        %v916 = vsel %vm914, %v912, %v863
        %v917 = vsel %vm913, 11, %v864
        %v918 = vsel %vm914, 11, %v865
        %v919 = vsel %vm913, %v875, %v866
        %v920 = vsel %vm914, %v875, %v867
        %v921 = vsel %vm913, %v878, %v868
        %v922 = vsel %vm914, %v878, %v869
        %v923 = vsel %vm913, %v886, %v870
        %v924 = vsel %vm914, %v886, %v871
        %v925 = vsel %vm913, %v894, %v872
        %v926 = vsel %vm914, %v894, %v873
        %s927 = sld [smem:[#allocation2 + $0x600]]
        %v928 = vstv %s927
        %v929 = vmul.f32 %v928, %v270
        %s930 = sld [smem:[#allocation2 + $0x601]]
        %v931 = vstv %s930
        %v932 = vmul.f32 %v931, %v270
        %v934 = vrot.slane %v932, 5
        %v935 = vrot.slane %v934, 4
        %v937 = vadd.f32 %v929, %v935
        %s938 = sld [smem:[#allocation2 + $0x602]]
        %v939 = vstv %s938
        %v940 = vmul.f32 %v939, %v270
        %v942 = vrot.slane %v940, 6
        %v943 = vrot.slane %v942, 4
        %v945 = vadd.f32 %v937, %v943
        %s946 = sld [smem:[#allocation2 + $0x603]]
        %v947 = vstv %s946
        %v948 = vmul.f32 %v947, %v270
        %v950 = vrot.slane %v948, 7
        %v951 = vrot.slane %v950, 4
        %v953 = vadd.f32 %v945, %v951
        %s954 = sld [smem:[#allocation5 + $0xc]]
        %v955 = vstv %s954
        %v956 = vadd.f32 %v285, %v955
        %v957 = vadd.f32 %v292, %v955
        %v958 = vmul.f32 %v953, 2.0
        %v960 = vperm.slane %v958, 0
        %v961 = vperm.slane %v958, 4
        %v964 = vsub.f32 %v956, %v960
        %v965 = vsub.f32 %v957, %v961
        %vm966 = vcmp.lt.f32.partialorder %v964, %v915
        %vm967 = vcmp.lt.f32.partialorder %v965, %v916
        %v968 = vsel %vm966, %v964, %v915
        %v969 = vsel %vm967, %v965, %v916
        %v970 = vsel %vm966, 12, %v917
        %v971 = vsel %vm967, 12, %v918
        %v972 = vsel %vm966, %v928, %v919
        %v973 = vsel %vm967, %v928, %v920
        %v974 = vsel %vm966, %v931, %v921
        %v975 = vsel %vm967, %v931, %v922
        %v976 = vsel %vm966, %v939, %v923
        %v977 = vsel %vm967, %v939, %v924
        %v978 = vsel %vm966, %v947, %v925
        %v979 = vsel %vm967, %v947, %v926
        %s980 = sld [smem:[#allocation2 + $0x680]]
        %v981 = vstv %s980
        %v982 = vmul.f32 %v981, %v270
        %s983 = sld [smem:[#allocation2 + $0x681]]
        %v984 = vstv %s983
        %v985 = vmul.f32 %v984, %v270
        %v987 = vrot.slane %v985, 5
        %v988 = vrot.slane %v987, 4
        %v990 = vadd.f32 %v982, %v988
        %s991 = sld [smem:[#allocation2 + $0x682]]
        %v992 = vstv %s991
        %v993 = vmul.f32 %v992, %v270
        %v995 = vrot.slane %v993, 6
        %v996 = vrot.slane %v995, 4
        %v998 = vadd.f32 %v990, %v996
        %s999 = sld [smem:[#allocation2 + $0x683]]
        %v1000 = vstv %s999
        %v1001 = vmul.f32 %v1000, %v270
        %v1003 = vrot.slane %v1001, 7
        %v1004 = vrot.slane %v1003, 4
        %v1006 = vadd.f32 %v998, %v1004
        %s1007 = sld [smem:[#allocation5 + $0xd]]
        %v1008 = vstv %s1007
        %v1009 = vadd.f32 %v285, %v1008
        %v1010 = vadd.f32 %v292, %v1008
        %v1011 = vmul.f32 %v1006, 2.0
        %v1013 = vperm.slane %v1011, 0
        %v1014 = vperm.slane %v1011, 4
        %v1017 = vsub.f32 %v1009, %v1013
        %v1018 = vsub.f32 %v1010, %v1014
        %vm1019 = vcmp.lt.f32.partialorder %v1017, %v968
        %vm1020 = vcmp.lt.f32.partialorder %v1018, %v969
        %v1021 = vsel %vm1019, %v1017, %v968
        %v1022 = vsel %vm1020, %v1018, %v969
        %v1023 = vsel %vm1019, 13, %v970
        %v1024 = vsel %vm1020, 13, %v971
        %v1025 = vsel %vm1019, %v981, %v972
        %v1026 = vsel %vm1020, %v981, %v973
        %v1027 = vsel %vm1019, %v984, %v974
        %v1028 = vsel %vm1020, %v984, %v975
        %v1029 = vsel %vm1019, %v992, %v976
        %v1030 = vsel %vm1020, %v992, %v977
        %v1031 = vsel %vm1019, %v1000, %v978
        %v1032 = vsel %vm1020, %v1000, %v979
        %s1033 = sld [smem:[#allocation2 + $0x700]]
        %v1034 = vstv %s1033
        %v1035 = vmul.f32 %v1034, %v270
        %s1036 = sld [smem:[#allocation2 + $0x701]]
        %v1037 = vstv %s1036
        %v1038 = vmul.f32 %v1037, %v270
        %v1040 = vrot.slane %v1038, 5
        %v1041 = vrot.slane %v1040, 4
        %v1043 = vadd.f32 %v1035, %v1041
        %s1044 = sld [smem:[#allocation2 + $0x702]]
        %v1045 = vstv %s1044
        %v1046 = vmul.f32 %v1045, %v270
        %v1048 = vrot.slane %v1046, 6
        %v1049 = vrot.slane %v1048, 4
        %v1051 = vadd.f32 %v1043, %v1049
        %s1052 = sld [smem:[#allocation2 + $0x703]]
        %v1053 = vstv %s1052
        %v1054 = vmul.f32 %v1053, %v270
        %v1056 = vrot.slane %v1054, 7
        %v1057 = vrot.slane %v1056, 4
        %v1059 = vadd.f32 %v1051, %v1057
        %s1060 = sld [smem:[#allocation5 + $0xe]]
        %v1061 = vstv %s1060
        %v1062 = vadd.f32 %v285, %v1061
        %v1063 = vadd.f32 %v292, %v1061
        %v1064 = vmul.f32 %v1059, 2.0
        %v1066 = vperm.slane %v1064, 0
        %v1067 = vperm.slane %v1064, 4
        %v1070 = vsub.f32 %v1062, %v1066
        %v1071 = vsub.f32 %v1063, %v1067
        %vm1072 = vcmp.lt.f32.partialorder %v1070, %v1021
        %vm1073 = vcmp.lt.f32.partialorder %v1071, %v1022
        %v1074 = vsel %vm1072, %v1070, %v1021
        %v1075 = vsel %vm1073, %v1071, %v1022
        %v1076 = vsel %vm1072, 14, %v1023
        %v1077 = vsel %vm1073, 14, %v1024
        %v1078 = vsel %vm1072, %v1034, %v1025
        %v1079 = vsel %vm1073, %v1034, %v1026
        %v1080 = vsel %vm1072, %v1037, %v1027
        %v1081 = vsel %vm1073, %v1037, %v1028
        %v1082 = vsel %vm1072, %v1045, %v1029
        %v1083 = vsel %vm1073, %v1045, %v1030
        %v1084 = vsel %vm1072, %v1053, %v1031
        %v1085 = vsel %vm1073, %v1053, %v1032
        %s1086 = sld [smem:[#allocation2 + $0x780]]
        %v1087 = vstv %s1086
        %v1088 = vmul.f32 %v1087, %v270
        %s1089 = sld [smem:[#allocation2 + $0x781]]
        %v1090 = vstv %s1089
        %v1091 = vmul.f32 %v1090, %v270
        %v1093 = vrot.slane %v1091, 5
        %v1094 = vrot.slane %v1093, 4
        %v1096 = vadd.f32 %v1088, %v1094
        %s1097 = sld [smem:[#allocation2 + $0x782]]
        %v1098 = vstv %s1097
        %v1099 = vmul.f32 %v1098, %v270
        %v1101 = vrot.slane %v1099, 6
        %v1102 = vrot.slane %v1101, 4
        %v1104 = vadd.f32 %v1096, %v1102
        %s1105 = sld [smem:[#allocation2 + $0x783]]
        %v1106 = vstv %s1105
        %v1107 = vmul.f32 %v1106, %v270
        %v1109 = vrot.slane %v1107, 7
        %v1110 = vrot.slane %v1109, 4
        %v1112 = vadd.f32 %v1104, %v1110
        %s1113 = sld [smem:[#allocation5 + $0xf]]
        %v1114 = vstv %s1113
        %v1115 = vadd.f32 %v285, %v1114
        %v1116 = vadd.f32 %v292, %v1114
        %v1117 = vmul.f32 %v1112, 2.0
        %v1119 = vperm.slane %v1117, 0
        %v1120 = vperm.slane %v1117, 4
        %v1123 = vsub.f32 %v1115, %v1119
        %v1124 = vsub.f32 %v1116, %v1120
        %vm1125 = vcmp.lt.f32.partialorder %v1123, %v1074
        %vm1126 = vcmp.lt.f32.partialorder %v1124, %v1075
        %v1127 = vsel %vm1125, 15, %v1076
        %v1128 = vsel %vm1126, 15, %v1077
        %v1129 = vsel %vm1125, %v1087, %v1078
        %v1130 = vsel %vm1126, %v1087, %v1079
        %v1131 = vsel %vm1125, %v1090, %v1080
        %v1132 = vsel %vm1126, %v1090, %v1081
        %v1133 = vsel %vm1125, %v1098, %v1082
        %v1134 = vsel %vm1126, %v1098, %v1083
        %v1135 = vsel %vm1125, %v1106, %v1084
        %v1136 = vsel %vm1126, %v1106, %v1085
        %v1137 = vrot.slane %v1128, 7
        %vm1138 = vcmask 1040384
        %v1139 = vsel %vm1138, %v1127, %v1137
        %v1140 = vlaneseq
        %vm1141 = vcmp.ge.s32.totalorder %v1140, 0
        %vm1142 = vcmp.lt.s32.totalorder %v1140, 256
        %vm1143 = vmand %vm1141, %vm1142
        %1144 = vst.msk [vmem:[%s250] sm:$0x3] %vm1143, %v1139
        %v1147 = vrot.slane %v1131, 7
        %v1148 = vrot.slane %v1132, 7
        %v1153 = vrot.slane %v1133, 6
        %v1154 = vrot.slane %v1134, 6
        %v1159 = vrot.slane %v1135, 5
        %v1160 = vrot.slane %v1136, 5
        %v1163 = vsel %vm1138, %v1129, %v1147
        %v1164 = vsel %vm1138, %v1130, %v1148
        %vm1165 = vcmask 1041408
        %v1166 = vsel %vm1165, %v1163, %v1153
        %v1167 = vsel %vm1165, %v1164, %v1154
        %vm1168 = vcmask 1042432
        %v1169 = vsel %vm1168, %v1166, %v1159
        %v1170 = vsel %vm1168, %v1167, %v1160
        %v1173 = vrot.slane %v1170, 4
        %v1174 = vsel %vm278, %v1169, %v1173
        %1176 = vst [vmem:[%s257] sm:$0xff] %v1174
        %s1177 = sand.u32 %s116, 1
        %s1178 = scalar_lea.sflag [#allocation3], %s1177
        %s1179 = sand.u32 %s116, 1
        %s1180 = smul.addr %s1179, 2
        %s1181 = scalar_lea.vmem [#allocation7], %s1180
        %s1182 = sand.u32 %s144, 1
        %s1183 = scalar_lea.sflag [#allocation9], %s1182
        %s1184 = sand.u32 %s144, 1
        %s1185 = smul.addr %s1184, 8
        %s1186 = scalar_lea.vmem [#allocation8], %s1185
        // Predicated region
        $region41: #{tpu_custom_call.1} parent=31 // pred_check
          %p1187 = pneg %p126
        $region42: #{tpu_custom_call.1} parent=31 // pred_check_branch
          %1189 = sbr.rel (%p1187) target = $region44
        $region43: #{tpu_custom_call.1} parent=31 // pred_region
          %s1190 = smul.u32 2, %s29
          %1192 = vsyncadd %s1178, 0
          %s1193 = smul.addr %s28, 2
          %s1194 = sadd.s32 %s1190, %s1193
          %s1195 = scalar_lea.hbm %s3, %s1194
          %s1197 = sshll.u32 %s1181, 4
          %s1198 = int_to_ptr.vmem [resolvable:$true] %s1197
          %s1199 = sshll.u32 %s1195, 4
          %s1200 = int_to_ptr.hbm [resolvable:$true] %s1199
          %1202 = dma.vmem_to_hbm [thread:$0]  %s1198, 32, %s1200, %s1178
        $region44: #{tpu_custom_call.1} parent=31 // pred_fallthru
          _
        // Predicated region
        $region45: #{tpu_custom_call.1} parent=31 // pred_check
          %p1203 = pneg %p154
        $region46: #{tpu_custom_call.1} parent=31 // pred_check_branch
          %1205 = sbr.rel (%p1203) target = $region48
        $region47: #{tpu_custom_call.1} parent=31 // pred_region
          %s1206 = smul.u32 2, %s29
          %1208 = vsyncadd %s1183, 0
          %s1209 = smul.addr %s28, 2
          %s1210 = sadd.s32 %s1206, %s1209
          %s1211 = smul.addr %s1210, 4
          %s1212 = scalar_lea.hbm %s4, %s1211
          %s1214 = sshll.u32 %s1186, 4
          %s1215 = int_to_ptr.vmem [resolvable:$true] %s1214
          %s1216 = sshll.u32 %s1212, 4
          %s1217 = int_to_ptr.hbm [resolvable:$true] %s1216
          %1219 = dma.vmem_to_hbm [thread:$0]  %s1215, 128, %s1217, %s1183
        $region48: #{tpu_custom_call.1} parent=31 // pred_fallthru
          _
      $region32: #{tpu_custom_call.1} parent=5 // pred_fallthru
        _
      %p1220 = scmp.le.s32.totalorder 2, %s19
      // Predicated region
      $region49: #{tpu_custom_call.1} parent=5 // pred_check
        %p1221 = pneg %p1220
      $region50: #{tpu_custom_call.1} parent=5 // pred_check_branch
        %1223 = sbr.rel (%p1221) target = $region52
      $region51: #{tpu_custom_call.1} parent=5 // pred_region
        %s1224 = ssub.s32 %s19, 2
        // Predicated region
        $region53: #{tpu_custom_call.1} parent=51 // pred_check
          %p1225 = pneg %p132
        $region54: #{tpu_custom_call.1} parent=51 // pred_check_branch
          %1227 = sbr.rel (%p1225) target = $region56
        $region55: #{tpu_custom_call.1} parent=51 // pred_region
          %s1228 = sand.u32 %s117, 1
          %s1229 = scalar_lea.sflag [#allocation3], %s1228
          %s1230 = sand.u32 %s117, 1
          %s1231 = smul.addr %s1230, 2
          %s1232 = scalar_lea.vmem [#allocation7], %s1231
          %1234 = dma.done %s1229, 32
        $region56: #{tpu_custom_call.1} parent=51 // pred_fallthru
          _
        // Predicated region
        $region57: #{tpu_custom_call.1} parent=51 // pred_check
          %p1235 = pneg %p160
        $region58: #{tpu_custom_call.1} parent=51 // pred_check_branch
          %1237 = sbr.rel (%p1235) target = $region60
        $region59: #{tpu_custom_call.1} parent=51 // pred_region
          %s1238 = sand.u32 %s145, 1
          %s1239 = scalar_lea.sflag [#allocation9], %s1238
          %s1240 = sand.u32 %s145, 1
          %s1241 = smul.addr %s1240, 8
          %s1242 = scalar_lea.vmem [#allocation8], %s1241
          %1244 = dma.done %s1239, 128
        $region60: #{tpu_custom_call.1} parent=51 // pred_fallthru
          _
      $region52: #{tpu_custom_call.1} parent=5 // pred_fallthru
        _
    $region6: #{tpu_custom_call.1} parent=1 // loop_footer
      %s23 = sadd.s32 1, %s19
    $region7: #{tpu_custom_call.1} parent=1 // loop_footer_branch
      %18 = sbr.rel target = $region3
    $region8: #{tpu_custom_call.1} parent=1 // loop_exit
      _
    %1245 = vsyncpa [#allocation3], 1
    %s1246 = scalar_lea.sflag [#allocation3], 1
    %1247 = vsyncpa %s1246, 1
    %1248 = vsyncpa [#allocation9], 1
    %s1249 = scalar_lea.sflag [#allocation9], 1
    %1250 = vsyncpa %s1249, 1
    %1251 = vsyncpa [#allocation4], 1
    %s1252 = scalar_lea.sflag [#allocation4], 1
    %1253 = vsyncpa %s1252, 1
    %1254 = vsyncpa [#allocation6], 1

</llo_original>
